<compile_context>
chip_gen: v6e
topology: v6e:2x2x1
jax: 0.10.0
libtpu: 0.0.40
codegen_flags: <defaults>
</compile_context>

<pallas_src>
import jax
import jax.numpy as jnp
from jax.experimental import pallas as pl
from jax.experimental.pallas import tpu as pltpu

HIDDEN = 500        # logical hidden width (fixed by the module definition)
LANE = 128
SUBLANE = 8


def _round_up(x, m):
    return (x + m - 1) // m * m


def _decoder_kernel(z_ref, w1_ref, b1_ref, w2_ref, b2_ref, w3_ref, b3_ref,
                    out_ref):
    # Layer 1: Linear(z_dim -> 512pad) + ReLU   (bf16 MXU, f32 accumulate)
    h1 = jnp.dot(z_ref[...].astype(jnp.bfloat16), w1_ref[...],
                 preferred_element_type=jnp.float32)
    h1 = jnp.maximum(h1 + b1_ref[...], 0.0)
    # Layer 2: Linear(512pad -> 512pad) + ReLU
    h2 = jnp.dot(h1.astype(jnp.bfloat16), w2_ref[...],
                 preferred_element_type=jnp.float32)
    h2 = jnp.maximum(h2 + b2_ref[...], 0.0)
    # Layer 3: Linear(512pad -> x_pad) + Sigmoid (ContinuousBernoulli probs)
    logits = jnp.dot(h2.astype(jnp.bfloat16), w3_ref[...],
                     preferred_element_type=jnp.float32) + b3_ref[...]
    # sigmoid(x) = 0.5*tanh(x/2) + 0.5: a single EUP transcendental instead of
    # exp + reciprocal (halves EUP slot pressure, the v6e/v7x binder), f32 so
    # it stays v5e-safe.  Clamp guards against any >1 rounding overshoot.
    probs = jnp.clip(0.5 * jnp.tanh(0.5 * logits) + 0.5, 0.0, 1.0)
    # bf16 store halves output writeback bytes / vst pressure.
    out_ref[...] = probs.astype(out_ref.dtype)


def decoder_probs(zs, params, x_dim, *, batch_tile=512):
    """Fused decoder MLP.  zs: (B, z_dim) f32 -> (B, x_dim) f32 probs.

    batch_tile: 512 default; multiples of 256 keep the 256-wide MXU on
    v6e/v7x fully fed (128/256 are also fine, e.g. on v5e's 128-wide MXU).
    """
    w1, b1, w2, b2, w3, b3 = params        # padded; weights bf16, biases f32
    B, z_dim = zs.shape
    h_pad = w1.shape[1]
    x_pad = w3.shape[1]

    # Batch tile: multiple of the 8-row sublane group; cap at the padded batch.
    tb = min(batch_tile, _round_up(B, SUBLANE))
    # Guarantee >=2 grid steps (unless the batch fits in one sublane group) so
    # dimension_semantics=("parallel",) can shard batch tiles across both v7x
    # TensorCores instead of idling one.
    if tb > SUBLANE and _round_up(B, tb) // tb < 2:
        tb = _round_up(tb // 2, SUBLANE)
    b_pad = _round_up(B, tb)
    if b_pad != B:
        zs = jnp.pad(zs, ((0, b_pad - B), (0, 0)))

    grid = (b_pad // tb,)

    def run(single_buffer_weights):
        if single_buffer_weights:
            # Constant-index blocks never change between grid steps: single
            # buffer keeps them VMEM-resident without a wasted second buffer.
            resident = lambda shape: pl.BlockSpec(
                shape, lambda i: (0, 0), pipeline_mode=pl.Buffered(1))
        else:
            resident = lambda shape: pl.BlockSpec(shape, lambda i: (0, 0))

        return pl.pallas_call(
            _decoder_kernel,
            out_shape=jax.ShapeDtypeStruct((b_pad, x_pad), jnp.bfloat16),
            grid=grid,
            in_specs=[
                pl.BlockSpec((tb, z_dim), lambda i: (i, 0)),
                resident((z_dim, h_pad)), resident((1, h_pad)),
                resident((h_pad, h_pad)), resident((1, h_pad)),
                resident((h_pad, x_pad)), resident((1, x_pad)),
            ],
            out_specs=pl.BlockSpec((tb, x_pad), lambda i: (i, 0)),
            compiler_params=pltpu.CompilerParams(
                dimension_semantics=("parallel",),   # batch tiles across TCs
                vmem_limit_bytes=32 << 20,
            ),
        )(zs, w1, b1, w2, b2, w3, b3)

    try:
        out = run(True)
    except Exception:
        # Fallback for JAX versions where BlockSpec pipeline_mode /
        # pl.Buffered(1) is not supported at the pallas_call level.
        out = run(False)

    return out[:B, :x_dim].astype(jnp.float32)


def init_decoder_params(key, z_dim, x_dim):
    """torch.nn.Linear-style init (U(-1/sqrt(fan_in), 1/sqrt(fan_in))), then
    zero-pad HIDDEN->512 and x_dim->mult-of-128.  Weights bf16, biases f32."""
    h_pad = _round_up(HIDDEN, LANE)      # 512
    x_pad = _round_up(x_dim, LANE)

    def linear(k, fan_in, fan_out, in_pad, out_pad):
        kw, kb = jax.random.split(k)
        bound = 1.0 / jnp.sqrt(jnp.float32(fan_in))
        w = jax.random.uniform(kw, (fan_in, fan_out), jnp.float32, -bound, bound)
        b = jax.random.uniform(kb, (fan_out,), jnp.float32, -bound, bound)
        w = jnp.pad(w, ((0, in_pad - fan_in), (0, out_pad - fan_out)))
        b = jnp.pad(b, (0, out_pad - fan_out))[None, :]
        return w.astype(jnp.bfloat16), b.astype(jnp.float32)

    k1, k2, k3 = jax.random.split(key, 3)
    w1, b1 = linear(k1, z_dim, HIDDEN, z_dim, h_pad)
    w2, b2 = linear(k2, HIDDEN, HIDDEN, h_pad, h_pad)
    w3, b3 = linear(k3, HIDDEN, x_dim, h_pad, x_pad)
    return (w1, b1, w2, b2, w3, b3)


def _reference_probs(zs, params, x_dim):
    """Pure-JAX reference with the same bf16-matmul / f32-accumulate math and
    the same bf16 output quantization as the kernel."""
    w1, b1, w2, b2, w3, b3 = params
    h1 = jnp.maximum(jnp.dot(zs.astype(jnp.bfloat16), w1,
                             preferred_element_type=jnp.float32) + b1, 0.0)
    h2 = jnp.maximum(jnp.dot(h1.astype(jnp.bfloat16), w2,
                             preferred_element_type=jnp.float32) + b2, 0.0)
    logits = jnp.dot(h2.astype(jnp.bfloat16), w3,
                     preferred_element_type=jnp.float32) + b3
    probs = jax.nn.sigmoid(logits).astype(jnp.bfloat16).astype(jnp.float32)
    return probs[:, :x_dim]


def continuous_bernoulli_independent_log_prob(probs, x, eps=1e-6):
    """Pure-JAX Independent(ContinuousBernoulli(probs), 1).log_prob(x) glue;
    not part of the kernel hot path."""
    p = jnp.clip(probs, eps, 1.0 - eps)
    log_unnorm = x * jnp.log(p) + (1.0 - x) * jnp.log1p(-p)
    near_half = jnp.abs(p - 0.5) < 1e-2
    p_safe = jnp.where(near_half, 0.25, p)
    log_c = jnp.log(jnp.abs(2.0 * jnp.arctanh(1.0 - 2.0 * p_safe))) \
        - jnp.log(jnp.abs(1.0 - 2.0 * p_safe))
    taylor = jnp.log(2.0) + 4.0 / 3.0 * (p - 0.5) ** 2
    log_norm = jnp.where(near_half, taylor, log_c)
    return jnp.sum(log_unnorm + log_norm, axis=-1)


if __name__ == "__main__":
    # Small shapes consistent with the module: batch=4, z_dim=8, x_dim=64.
    B, Z_DIM, X_DIM = 4, 8, 64

    key = jax.random.PRNGKey(0)
    k_params, k_z = jax.random.split(key)
    params = init_decoder_params(k_params, Z_DIM, X_DIM)
    zs = jax.random.normal(k_z, (B, Z_DIM), dtype=jnp.float32)

    probs = jax.block_until_ready(decoder_probs(zs, params, X_DIM))
    ref = _reference_probs(zs, params, X_DIM)
    assert probs.shape == (B, X_DIM)
    assert bool(jnp.all(probs >= 0.0)) and bool(jnp.all(probs <= 1.0))
    assert jnp.allclose(probs, ref, atol=8e-3, rtol=0.0), \
        float(jnp.max(jnp.abs(probs - ref)))

    # Ragged batch with a multi-step grid (batch_tile < b_pad).
    B2 = 20
    zs2 = jax.random.normal(jax.random.PRNGKey(2), (B2, Z_DIM), jnp.float32)
    probs2 = jax.block_until_ready(decoder_probs(zs2, params, X_DIM,
                                                 batch_tile=8))
    ref2 = _reference_probs(zs2, params, X_DIM)
    assert probs2.shape == (B2, X_DIM)
    assert jnp.allclose(probs2, ref2, atol=8e-3, rtol=0.0)

    # Exercise the distribution glue once (log_prob of a random target).
    x_target = jax.random.uniform(jax.random.PRNGKey(1), (B, X_DIM), jnp.float32)
    lp = jax.block_until_ready(
        continuous_bernoulli_independent_log_prob(probs, x_target))
    assert lp.shape == (B,)

    print("KERNEL_OK")
</pallas_src>

<mosaic_0001>
module attributes {stable_mosaic.version = 11 : i64} {
  func.func @_decoder_kernel(%arg0: i32, %arg1: memref<8x8xf32, #tpu.memory_space<vmem>>, %arg2: memref<8x512xbf16, #tpu.memory_space<vmem>>, %arg3: memref<1x512xf32, #tpu.memory_space<vmem>>, %arg4: memref<512x512xbf16, #tpu.memory_space<vmem>>, %arg5: memref<1x512xf32, #tpu.memory_space<vmem>>, %arg6: memref<512x128xbf16, #tpu.memory_space<vmem>>, %arg7: memref<1x128xf32, #tpu.memory_space<vmem>>, %arg8: memref<8x128xbf16, #tpu.memory_space<vmem>>) attributes {dimension_semantics = [#tpu.dimension_semantics<parallel>], iteration_bounds = array<i64: 1>, scalar_prefetch = 0 : i64, scratch_operands = 0 : i64, tpu.core_type = #tpu.core_type<tc>, window_params = [{transform_indices = @transform_0, window_bounds = array<i64: 8, 8>}, {pipeline_mode = #tpu.pipeline_mode<synchronous>, transform_indices = @transform_1, window_bounds = array<i64: 8, 512>}, {pipeline_mode = #tpu.pipeline_mode<synchronous>, transform_indices = @transform_2, window_bounds = array<i64: 1, 512>}, {pipeline_mode = #tpu.pipeline_mode<synchronous>, transform_indices = @transform_3, window_bounds = array<i64: 512, 512>}, {pipeline_mode = #tpu.pipeline_mode<synchronous>, transform_indices = @transform_4, window_bounds = array<i64: 1, 512>}, {pipeline_mode = #tpu.pipeline_mode<synchronous>, transform_indices = @transform_5, window_bounds = array<i64: 512, 128>}, {pipeline_mode = #tpu.pipeline_mode<synchronous>, transform_indices = @transform_6, window_bounds = array<i64: 1, 128>}, {transform_indices = @transform_7, window_bounds = array<i64: 8, 128>}]} {
    %c0 = arith.constant 0 : index
    %c0_0 = arith.constant 0 : index
    %0 = vector.load %arg1[%c0, %c0_0] : memref<8x8xf32, #tpu.memory_space<vmem>>, vector<8x8xf32>
    %1 = arith.truncf %0 : vector<8x8xf32> to vector<8x8xbf16>
    %c0_1 = arith.constant 0 : index
    %c0_2 = arith.constant 0 : index
    %2 = vector.load %arg2[%c0_1, %c0_2] : memref<8x512xbf16, #tpu.memory_space<vmem>>, vector<8x512xbf16>
    %cst = arith.constant dense<0.000000e+00> : vector<8x512xf32>
    %3 = tpu.matmul %1, %2, %cst {dimension_numbers = #tpu.dot_dimension_numbers<[1], [0], [0], [1], [0, 0, 1, 1], [], []>} : vector<8x8xbf16>, vector<8x512xbf16>, vector<8x512xf32> -> vector<8x512xf32>
    %c0_3 = arith.constant 0 : index
    %c0_4 = arith.constant 0 : index
    %4 = vector.load %arg3[%c0_3, %c0_4] : memref<1x512xf32, #tpu.memory_space<vmem>>, vector<1x512xf32>
    %5 = vector.broadcast %4 : vector<1x512xf32> to vector<8x512xf32>
    %6 = arith.addf %3, %5 : vector<8x512xf32>
    %cst_5 = arith.constant 0.000000e+00 : f32
    %7 = vector.broadcast %cst_5 : f32 to vector<8x512xf32>
    %8 = arith.maximumf %6, %7 : vector<8x512xf32>
    %9 = arith.truncf %8 : vector<8x512xf32> to vector<8x512xbf16>
    %c0_6 = arith.constant 0 : index
    %c0_7 = arith.constant 0 : index
    %10 = vector.load %arg4[%c0_6, %c0_7] : memref<512x512xbf16, #tpu.memory_space<vmem>>, vector<512x512xbf16>
    %cst_8 = arith.constant dense<0.000000e+00> : vector<8x512xf32>
    %11 = tpu.matmul %9, %10, %cst_8 {dimension_numbers = #tpu.dot_dimension_numbers<[1], [0], [0], [1], [0, 0, 1, 1], [], []>} : vector<8x512xbf16>, vector<512x512xbf16>, vector<8x512xf32> -> vector<8x512xf32>
    %c0_9 = arith.constant 0 : index
    %c0_10 = arith.constant 0 : index
    %12 = vector.load %arg5[%c0_9, %c0_10] : memref<1x512xf32, #tpu.memory_space<vmem>>, vector<1x512xf32>
    %13 = vector.broadcast %12 : vector<1x512xf32> to vector<8x512xf32>
    %14 = arith.addf %11, %13 : vector<8x512xf32>
    %cst_11 = arith.constant 0.000000e+00 : f32
    %15 = vector.broadcast %cst_11 : f32 to vector<8x512xf32>
    %16 = arith.maximumf %14, %15 : vector<8x512xf32>
    %17 = arith.truncf %16 : vector<8x512xf32> to vector<8x512xbf16>
    %c0_12 = arith.constant 0 : index
    %c0_13 = arith.constant 0 : index
    %18 = vector.load %arg6[%c0_12, %c0_13] : memref<512x128xbf16, #tpu.memory_space<vmem>>, vector<512x128xbf16>
    %cst_14 = arith.constant dense<0.000000e+00> : vector<8x128xf32>
    %19 = tpu.matmul %17, %18, %cst_14 {dimension_numbers = #tpu.dot_dimension_numbers<[1], [0], [0], [1], [0, 0, 1, 1], [], []>} : vector<8x512xbf16>, vector<512x128xbf16>, vector<8x128xf32> -> vector<8x128xf32>
    %c0_15 = arith.constant 0 : index
    %c0_16 = arith.constant 0 : index
    %20 = vector.load %arg7[%c0_15, %c0_16] : memref<1x128xf32, #tpu.memory_space<vmem>>, vector<1x128xf32>
    %21 = vector.broadcast %20 : vector<1x128xf32> to vector<8x128xf32>
    %22 = arith.addf %19, %21 : vector<8x128xf32>
    %cst_17 = arith.constant 5.000000e-01 : f32
    %23 = vector.broadcast %cst_17 : f32 to vector<8x128xf32>
    %24 = arith.mulf %23, %22 : vector<8x128xf32>
    %25 = math.tanh %24 : vector<8x128xf32>
    %cst_18 = arith.constant 5.000000e-01 : f32
    %26 = vector.broadcast %cst_18 : f32 to vector<8x128xf32>
    %27 = arith.mulf %26, %25 : vector<8x128xf32>
    %cst_19 = arith.constant 5.000000e-01 : f32
    %28 = vector.broadcast %cst_19 : f32 to vector<8x128xf32>
    %29 = arith.addf %27, %28 : vector<8x128xf32>
    %cst_20 = arith.constant 0.000000e+00 : f32
    %cst_21 = arith.constant 1.000000e+00 : f32
    %30 = vector.broadcast %cst_20 : f32 to vector<8x128xf32>
    %31 = arith.maximumf %30, %29 : vector<8x128xf32>
    %32 = vector.broadcast %cst_21 : f32 to vector<8x128xf32>
    %33 = arith.minimumf %32, %31 : vector<8x128xf32>
    %34 = arith.truncf %33 : vector<8x128xf32> to vector<8x128xbf16>
    %c0_22 = arith.constant 0 : index
    %c0_23 = arith.constant 0 : index
    %35 = vector.load %arg8[%c0_22, %c0_23] : memref<8x128xbf16, #tpu.memory_space<vmem>>, vector<8x128xbf16>
    tpu.vector_store %arg8[%c0_22, %c0_23], %34 {strides = array<i32>} : memref<8x128xbf16, #tpu.memory_space<vmem>>, vector<8x128xbf16>,
    return
  }
  func.func @transform_0(%arg0: i32) -> (i32, i32) {
    %c0_i32 = arith.constant 0 : i32
    %c0_i32_0 = arith.constant 0 : i32
    return %arg0, %c0_i32 : i32, i32
  }
  func.func @transform_1(%arg0: i32) -> (i32, i32) {
    %c0_i32 = arith.constant 0 : i32
    %c0_i32_0 = arith.constant 0 : i32
    %c0_i32_1 = arith.constant 0 : i32
    return %c0_i32, %c0_i32_0 : i32, i32
  }
  func.func @transform_2(%arg0: i32) -> (i32, i32) {
    %c0_i32 = arith.constant 0 : i32
    %c0_i32_0 = arith.constant 0 : i32
    %c0_i32_1 = arith.constant 0 : i32
    return %c0_i32, %c0_i32_0 : i32, i32
  }
  func.func @transform_3(%arg0: i32) -> (i32, i32) {
    %c0_i32 = arith.constant 0 : i32
    %c0_i32_0 = arith.constant 0 : i32
    %c0_i32_1 = arith.constant 0 : i32
    return %c0_i32, %c0_i32_0 : i32, i32
  }
  func.func @transform_4(%arg0: i32) -> (i32, i32) {
    %c0_i32 = arith.constant 0 : i32
    %c0_i32_0 = arith.constant 0 : i32
    %c0_i32_1 = arith.constant 0 : i32
    return %c0_i32, %c0_i32_0 : i32, i32
  }
  func.func @transform_5(%arg0: i32) -> (i32, i32) {
    %c0_i32 = arith.constant 0 : i32
    %c0_i32_0 = arith.constant 0 : i32
    %c0_i32_1 = arith.constant 0 : i32
    return %c0_i32, %c0_i32_0 : i32, i32
  }
  func.func @transform_6(%arg0: i32) -> (i32, i32) {
    %c0_i32 = arith.constant 0 : i32
    %c0_i32_0 = arith.constant 0 : i32
    %c0_i32_1 = arith.constant 0 : i32
    return %c0_i32, %c0_i32_0 : i32, i32
  }
  func.func @transform_7(%arg0: i32) -> (i32, i32) {
    %c0_i32 = arith.constant 0 : i32
    %c0_i32_0 = arith.constant 0 : i32
    return %arg0, %c0_i32 : i32, i32
  }
}

module attributes {stable_mosaic.version = 11 : i64} {
  func.func @_decoder_kernel(%arg0: i32, %arg1: memref<8x8xf32, #tpu.memory_space<vmem>>, %arg2: memref<8x512xbf16, #tpu.memory_space<vmem>>, %arg3: memref<1x512xf32, #tpu.memory_space<vmem>>, %arg4: memref<512x512xbf16, #tpu.memory_space<vmem>>, %arg5: memref<1x512xf32, #tpu.memory_space<vmem>>, %arg6: memref<512x128xbf16, #tpu.memory_space<vmem>>, %arg7: memref<1x128xf32, #tpu.memory_space<vmem>>, %arg8: memref<8x128xbf16, #tpu.memory_space<vmem>>) attributes {dimension_semantics = [#tpu.dimension_semantics<parallel>], iteration_bounds = array<i64: 1>, scalar_prefetch = 0 : i64, scratch_operands = 0 : i64, tpu.core_type = #tpu.core_type<tc>, window_params = [{transform_indices = @transform_0, window_bounds = array<i64: 8, 8>}, {pipeline_mode = #tpu.pipeline_mode<synchronous>, transform_indices = @transform_1, window_bounds = array<i64: 8, 512>}, {pipeline_mode = #tpu.pipeline_mode<synchronous>, transform_indices = @transform_2, window_bounds = array<i64: 1, 512>}, {pipeline_mode = #tpu.pipeline_mode<synchronous>, transform_indices = @transform_3, window_bounds = array<i64: 512, 512>}, {pipeline_mode = #tpu.pipeline_mode<synchronous>, transform_indices = @transform_4, window_bounds = array<i64: 1, 512>}, {pipeline_mode = #tpu.pipeline_mode<synchronous>, transform_indices = @transform_5, window_bounds = array<i64: 512, 128>}, {pipeline_mode = #tpu.pipeline_mode<synchronous>, transform_indices = @transform_6, window_bounds = array<i64: 1, 128>}, {transform_indices = @transform_7, window_bounds = array<i64: 8, 128>}]} {
    %c0 = arith.constant 0 : index
    %c0_0 = arith.constant 0 : index
    %0 = vector.load %arg1[%c0, %c0_0] : memref<8x8xf32, #tpu.memory_space<vmem>>, vector<8x8xf32>
    %1 = arith.truncf %0 : vector<8x8xf32> to vector<8x8xbf16>
    %c0_1 = arith.constant 0 : index
    %c0_2 = arith.constant 0 : index
    %2 = vector.load %arg2[%c0_1, %c0_2] : memref<8x512xbf16, #tpu.memory_space<vmem>>, vector<8x512xbf16>
    %cst = arith.constant dense<0.000000e+00> : vector<8x512xf32>
    %3 = tpu.matmul %1, %2, %cst {dimension_numbers = #tpu.dot_dimension_numbers<[1], [0], [0], [1], [0, 0, 1, 1], [], []>} : vector<8x8xbf16>, vector<8x512xbf16>, vector<8x512xf32> -> vector<8x512xf32>
    %c0_3 = arith.constant 0 : index
    %c0_4 = arith.constant 0 : index
    %4 = vector.load %arg3[%c0_3, %c0_4] : memref<1x512xf32, #tpu.memory_space<vmem>>, vector<1x512xf32>
    %5 = vector.broadcast %4 : vector<1x512xf32> to vector<8x512xf32>
    %6 = arith.addf %3, %5 : vector<8x512xf32>
    %cst_5 = arith.constant 0.000000e+00 : f32
    %7 = vector.broadcast %cst_5 : f32 to vector<8x512xf32>
    %8 = arith.maximumf %6, %7 : vector<8x512xf32>
    %9 = arith.truncf %8 : vector<8x512xf32> to vector<8x512xbf16>
    %c0_6 = arith.constant 0 : index
    %c0_7 = arith.constant 0 : index
    %10 = vector.load %arg4[%c0_6, %c0_7] : memref<512x512xbf16, #tpu.memory_space<vmem>>, vector<512x512xbf16>
    %cst_8 = arith.constant dense<0.000000e+00> : vector<8x512xf32>
    %11 = tpu.matmul %9, %10, %cst_8 {dimension_numbers = #tpu.dot_dimension_numbers<[1], [0], [0], [1], [0, 0, 1, 1], [], []>} : vector<8x512xbf16>, vector<512x512xbf16>, vector<8x512xf32> -> vector<8x512xf32>
    %c0_9 = arith.constant 0 : index
    %c0_10 = arith.constant 0 : index
    %12 = vector.load %arg5[%c0_9, %c0_10] : memref<1x512xf32, #tpu.memory_space<vmem>>, vector<1x512xf32>
    %13 = vector.broadcast %12 : vector<1x512xf32> to vector<8x512xf32>
    %14 = arith.addf %11, %13 : vector<8x512xf32>
    %cst_11 = arith.constant 0.000000e+00 : f32
    %15 = vector.broadcast %cst_11 : f32 to vector<8x512xf32>
    %16 = arith.maximumf %14, %15 : vector<8x512xf32>
    %17 = arith.truncf %16 : vector<8x512xf32> to vector<8x512xbf16>
    %c0_12 = arith.constant 0 : index
    %c0_13 = arith.constant 0 : index
    %18 = vector.load %arg6[%c0_12, %c0_13] : memref<512x128xbf16, #tpu.memory_space<vmem>>, vector<512x128xbf16>
    %cst_14 = arith.constant dense<0.000000e+00> : vector<8x128xf32>
    %19 = tpu.matmul %17, %18, %cst_14 {dimension_numbers = #tpu.dot_dimension_numbers<[1], [0], [0], [1], [0, 0, 1, 1], [], []>} : vector<8x512xbf16>, vector<512x128xbf16>, vector<8x128xf32> -> vector<8x128xf32>
    %c0_15 = arith.constant 0 : index
    %c0_16 = arith.constant 0 : index
    %20 = vector.load %arg7[%c0_15, %c0_16] : memref<1x128xf32, #tpu.memory_space<vmem>>, vector<1x128xf32>
    %21 = vector.broadcast %20 : vector<1x128xf32> to vector<8x128xf32>
    %22 = arith.addf %19, %21 : vector<8x128xf32>
    %cst_17 = arith.constant 5.000000e-01 : f32
    %23 = vector.broadcast %cst_17 : f32 to vector<8x128xf32>
    %24 = arith.mulf %23, %22 : vector<8x128xf32>
    %25 = math.tanh %24 : vector<8x128xf32>
    %cst_18 = arith.constant 5.000000e-01 : f32
    %26 = vector.broadcast %cst_18 : f32 to vector<8x128xf32>
    %27 = arith.mulf %26, %25 : vector<8x128xf32>
    %cst_19 = arith.constant 5.000000e-01 : f32
    %28 = vector.broadcast %cst_19 : f32 to vector<8x128xf32>
    %29 = arith.addf %27, %28 : vector<8x128xf32>
    %cst_20 = arith.constant 0.000000e+00 : f32
    %cst_21 = arith.constant 1.000000e+00 : f32
    %30 = vector.broadcast %cst_20 : f32 to vector<8x128xf32>
    %31 = arith.maximumf %30, %29 : vector<8x128xf32>
    %32 = vector.broadcast %cst_21 : f32 to vector<8x128xf32>
    %33 = arith.minimumf %32, %31 : vector<8x128xf32>
    %34 = arith.truncf %33 : vector<8x128xf32> to vector<8x128xbf16>
    %c0_22 = arith.constant 0 : index
    %c0_23 = arith.constant 0 : index
    %35 = vector.load %arg8[%c0_22, %c0_23] : memref<8x128xbf16, #tpu.memory_space<vmem>>, vector<8x128xbf16>
    tpu.vector_store %arg8[%c0_22, %c0_23], %34 {strides = array<i32>} : memref<8x128xbf16, #tpu.memory_space<vmem>>, vector<8x128xbf16>,
    return
  }
  func.func @transform_0(%arg0: i32) -> (i32, i32) {
    %c0_i32 = arith.constant 0 : i32
    %c0_i32_0 = arith.constant 0 : i32
    return %arg0, %c0_i32 : i32, i32
  }
  func.func @transform_1(%arg0: i32) -> (i32, i32) {
    %c0_i32 = arith.constant 0 : i32
    %c0_i32_0 = arith.constant 0 : i32
    %c0_i32_1 = arith.constant 0 : i32
    return %c0_i32, %c0_i32_0 : i32, i32
  }
  func.func @transform_2(%arg0: i32) -> (i32, i32) {
    %c0_i32 = arith.constant 0 : i32
    %c0_i32_0 = arith.constant 0 : i32
    %c0_i32_1 = arith.constant 0 : i32
    return %c0_i32, %c0_i32_0 : i32, i32
  }
  func.func @transform_3(%arg0: i32) -> (i32, i32) {
    %c0_i32 = arith.constant 0 : i32
    %c0_i32_0 = arith.constant 0 : i32
    %c0_i32_1 = arith.constant 0 : i32
    return %c0_i32, %c0_i32_0 : i32, i32
  }
  func.func @transform_4(%arg0: i32) -> (i32, i32) {
    %c0_i32 = arith.constant 0 : i32
    %c0_i32_0 = arith.constant 0 : i32
    %c0_i32_1 = arith.constant 0 : i32
    return %c0_i32, %c0_i32_0 : i32, i32
  }
  func.func @transform_5(%arg0: i32) -> (i32, i32) {
    %c0_i32 = arith.constant 0 : i32
    %c0_i32_0 = arith.constant 0 : i32
    %c0_i32_1 = arith.constant 0 : i32
    return %c0_i32, %c0_i32_0 : i32, i32
  }
  func.func @transform_6(%arg0: i32) -> (i32, i32) {
    %c0_i32 = arith.constant 0 : i32
    %c0_i32_0 = arith.constant 0 : i32
    %c0_i32_1 = arith.constant 0 : i32
    return %c0_i32, %c0_i32_0 : i32, i32
  }
  func.func @transform_7(%arg0: i32) -> (i32, i32) {
    %c0_i32 = arith.constant 0 : i32
    %c0_i32_0 = arith.constant 0 : i32
    return %arg0, %c0_i32 : i32, i32
  }
}

</mosaic_0001>

<llo_original>
// kernel: tpu_custom_call.1
$region0: #{tpu_custom_call.1}
  #allocation0 [shape = 'u32[]', space=smem, size = 0x4, offset = 0x4, fixed_abs, tag = 'smem constant byte address 0x4 - core index']
  #allocation1 [shape = 'u32[144,128]{1,0:T(1,128)}', space=vmem, size = 0x12000, scoped, tag = 'internal scratch']
  %s0 = inlined_call_operand.hbm [shape: f32[8,8], index: 0, kind: input, shape index: {}]
  %s1 = inlined_call_operand.hbm [shape: bf16[8,512], index: 1, kind: input, shape index: {}]
  %s2 = inlined_call_operand.hbm [shape: f32[1,512], index: 2, kind: input, shape index: {}]
  %s3 = inlined_call_operand.hbm [shape: bf16[512,512], index: 3, kind: input, shape index: {}]
  %s4 = inlined_call_operand.vmem [shape: f32[1,512], index: 4, kind: input, shape index: {}]
  %s5 = inlined_call_operand.hbm [shape: bf16[512,128], index: 5, kind: input, shape index: {}]
  %s6 = inlined_call_operand.vmem [shape: f32[1,128], index: 6, kind: input, shape index: {}]
  %s7 = inlined_call_operand.hbm [shape: bf16[8,128], index: 7, kind: output, shape index: {}]
  %s8 = sld [smem:[#allocation0]]
  $region58: #{tpu_custom_call.1} parent=0
    _
  %s10 = ssub.s32 1, %s8
  %s11 = scalar_select 0, %s10, %s8
  $region1: #{tpu_custom_call.1} parent=0
    #allocation2 [shape = 'u8[4096]{0}', space=vmem, size = 0x1000, scoped, tag = 'input window, operand 0, single buffered']
    #allocation3 [shape = 's32[1]{0}', space=sflag, size = 0x4, scoped, tag = 'scoped memory for tpu_custom_call.1']
    #allocation4 [shape = 's32[1]{0}', space=sflag, size = 0x4, scoped, tag = 'scoped memory for tpu_custom_call.1']
    #allocation5 [shape = 'u8[8192]{0}', space=vmem, size = 0x2000, scoped, tag = 'input window, operand 1, single buffered']
    #allocation6 [shape = 's32[1]{0}', space=sflag, size = 0x4, scoped, tag = 'scoped memory for tpu_custom_call.1']
    #allocation7 [shape = 'u8[2048]{0}', space=vmem, size = 0x800, scoped, tag = 'input window, operand 2, single buffered']
    #allocation8 [shape = 'u8[524288]{0}', space=vmem, size = 0x80000, scoped, tag = 'input window, operand 3, single buffered']
    #allocation9 [shape = 's32[1]{0}', space=sflag, size = 0x4, scoped, tag = 'scoped memory for tpu_custom_call.1']
    #allocation10 [shape = 'u8[131072]{0}', space=vmem, size = 0x20000, scoped, tag = 'input window, operand 5, single buffered']
    #allocation11 [shape = 'u8[2048]{0}', space=vmem, size = 0x800, scoped, tag = 'output window, operand 0, single buffered']
    %12 = vsyncpa [#allocation3], 0
    %13 = vsyncpa [#allocation6], 0
    %14 = vsyncpa [#allocation9], 0
    %15 = vsyncpa [#allocation4], 0
    // Predicated region
    $region2: #{tpu_custom_call.1} parent=1 // pred_check
      _
    $region3: #{tpu_custom_call.1} parent=1 // pred_check_branch
      %17 = sbr.rel (0) target = $region5
    $region4: #{tpu_custom_call.1} parent=1 // pred_region
      %s19 = ssub.s32 128, 128
      %20 = vsyncadd [#allocation3], %s19
      %s22 = sshll.u32 [#allocation2], 4
      %s23 = int_to_ptr.vmem [resolvable:$true] %s22
      %25 = dma.hbm_to_vmem [thread:$0]  %s0, 128, %s23, [#allocation3]
    $region5: #{tpu_custom_call.1} parent=1 // pred_fallthru
      _
    // Predicated region
    $region6: #{tpu_custom_call.1} parent=1 // pred_check
      _
    $region7: #{tpu_custom_call.1} parent=1 // pred_check_branch
      %27 = sbr.rel (0) target = $region9
    $region8: #{tpu_custom_call.1} parent=1 // pred_region
      %s29 = ssub.s32 256, 256
      %30 = vsyncadd [#allocation6], %s29
      %s32 = sshll.u32 [#allocation5], 4
      %s33 = int_to_ptr.vmem [resolvable:$true] %s32
      %35 = dma.hbm_to_vmem [thread:$0]  %s1, 256, %s33, [#allocation6]
    $region9: #{tpu_custom_call.1} parent=1 // pred_fallthru
      _
    // Predicated region
    $region10: #{tpu_custom_call.1} parent=1 // pred_check
      _
    $region11: #{tpu_custom_call.1} parent=1 // pred_check_branch
      %37 = sbr.rel (0) target = $region13
    $region12: #{tpu_custom_call.1} parent=1 // pred_region
      %s39 = ssub.s32 64, 64
      %40 = vsyncadd [#allocation6], %s39
      %s42 = sshll.u32 [#allocation7], 4
      %s43 = int_to_ptr.vmem [resolvable:$true] %s42
      %45 = dma.hbm_to_vmem [thread:$0]  %s2, 64, %s43, [#allocation6]
    $region13: #{tpu_custom_call.1} parent=1 // pred_fallthru
      _
    // Predicated region
    $region14: #{tpu_custom_call.1} parent=1 // pred_check
      _
    $region15: #{tpu_custom_call.1} parent=1 // pred_check_branch
      %47 = sbr.rel (0) target = $region17
    $region16: #{tpu_custom_call.1} parent=1 // pred_region
      %s49 = ssub.s32 16384, 16384
      %50 = vsyncadd [#allocation9], %s49
      %s51 = sshll.u32 [#allocation8], 4
      %s52 = int_to_ptr.vmem [resolvable:$true] %s51
      %57 = dma.hbm_to_vmem [thread:$0]  %s3, 16384, %s52, [#allocation9], 256, 256, 16
    $region17: #{tpu_custom_call.1} parent=1 // pred_fallthru
      _
    // Predicated region
    $region18: #{tpu_custom_call.1} parent=1 // pred_check
      _
    $region19: #{tpu_custom_call.1} parent=1 // pred_check_branch
      %59 = sbr.rel (0) target = $region21
    $region20: #{tpu_custom_call.1} parent=1 // pred_region
      _
    $region21: #{tpu_custom_call.1} parent=1 // pred_fallthru
      _
    // Predicated region
    $region22: #{tpu_custom_call.1} parent=1 // pred_check
      _
    $region23: #{tpu_custom_call.1} parent=1 // pred_check_branch
      %61 = sbr.rel (0) target = $region25
    $region24: #{tpu_custom_call.1} parent=1 // pred_region
      %s63 = ssub.s32 4096, 4096
      %64 = vsyncadd [#allocation9], %s63
      %s65 = sshll.u32 [#allocation10], 4
      %s66 = int_to_ptr.vmem [resolvable:$true] %s65
      %71 = dma.hbm_to_vmem [thread:$0]  %s5, 4096, %s66, [#allocation9], 64, 64, 4
    $region25: #{tpu_custom_call.1} parent=1 // pred_fallthru
      _
    // Predicated region
    $region26: #{tpu_custom_call.1} parent=1 // pred_check
      _
    $region27: #{tpu_custom_call.1} parent=1 // pred_check_branch
      %73 = sbr.rel (0) target = $region29
    $region28: #{tpu_custom_call.1} parent=1 // pred_region
      _
    $region29: #{tpu_custom_call.1} parent=1 // pred_fallthru
      _
    // Predicated region
    $region30: #{tpu_custom_call.1} parent=1 // pred_check
      _
    $region31: #{tpu_custom_call.1} parent=1 // pred_check_branch
      %75 = sbr.rel (0) target = $region33
    $region32: #{tpu_custom_call.1} parent=1 // pred_region
      %76 = dma.done [#allocation3], 128
    $region33: #{tpu_custom_call.1} parent=1 // pred_fallthru
      _
    // Predicated region
    $region34: #{tpu_custom_call.1} parent=1 // pred_check
      _
    $region35: #{tpu_custom_call.1} parent=1 // pred_check_branch
      %78 = sbr.rel (0) target = $region37
    $region36: #{tpu_custom_call.1} parent=1 // pred_region
      %79 = dma.done [#allocation6], 256
    $region37: #{tpu_custom_call.1} parent=1 // pred_fallthru
      _
    // Predicated region
    $region38: #{tpu_custom_call.1} parent=1 // pred_check
      _
    $region39: #{tpu_custom_call.1} parent=1 // pred_check_branch
      %81 = sbr.rel (0) target = $region41
    $region40: #{tpu_custom_call.1} parent=1 // pred_region
      %82 = dma.done [#allocation6], 64
    $region41: #{tpu_custom_call.1} parent=1 // pred_fallthru
      _
    // Predicated region
    $region42: #{tpu_custom_call.1} parent=1 // pred_check
      _
    $region43: #{tpu_custom_call.1} parent=1 // pred_check_branch
      %84 = sbr.rel (0) target = $region45
    $region44: #{tpu_custom_call.1} parent=1 // pred_region
      %85 = dma.done [#allocation9], 16384
    $region45: #{tpu_custom_call.1} parent=1 // pred_fallthru
      _
    // Predicated region
    $region46: #{tpu_custom_call.1} parent=1 // pred_check
      _
    $region47: #{tpu_custom_call.1} parent=1 // pred_check_branch
      %87 = sbr.rel (0) target = $region49
    $region48: #{tpu_custom_call.1} parent=1 // pred_region
      %88 = dma.done [#allocation9], 4096
    $region49: #{tpu_custom_call.1} parent=1 // pred_fallthru
      _
    %v90 = vld [vmem:[#allocation2] sm:$0xff]
    %v91 = vpack.c.bf16 %v90, %v90
    %v92 = vld [vmem:[#allocation5] sm:$0xff]
    %v93 = vld [vmem:[#allocation5 + $0x8] sm:$0xff]
    %v94 = vld [vmem:[#allocation7] sm:$0xf]
    %v96 = vlaneseq
    %v97 = vshrl.u32 %v96, 7
    %v98 = vsub.s32 0, %v97
    %v99 = vrot.slane %v94, %v98
    %v100 = vlaneseq
    %v101 = vshrl.u32 %v100, 7
    %v102 = vsub.s32 1, %v101
    %v103 = vrot.slane %v94, %v102
    %v104 = vlaneseq
    %v105 = vshrl.u32 %v104, 7
    %v106 = vsub.s32 2, %v105
    %v107 = vrot.slane %v94, %v106
    %v108 = vlaneseq
    %v109 = vshrl.u32 %v108, 7
    %v110 = vsub.s32 3, %v109
    %v111 = vrot.slane %v94, %v110
    %v118 = vunpack.c.l.b16 %v92
    %v119 = vunpack.c.h.b16 %v92
    %v120 = vunpack.c.l.b16 %v93
    %v121 = vunpack.c.h.b16 %v93
    %v122 = vpack.c.b16 %v118, %v118
    %v123 = vpack.c.b16 %v119, %v119
    %v124 = vpack.c.b16 %v120, %v120
    %v125 = vpack.c.b16 %v121, %v121
    %vm126 = vcmask 64512
    %v128 = vsel %vm126, %v91, 0
    %vm130 = vcmask 1043456
    %v132 = vsel %vm130, %v122, 0
    %v135 = vsel %vm130, %v123, 0
    %v138 = vsel %vm130, %v124, 0
    %v141 = vsel %vm130, %v125, 0
    %143 = vmatprep.subr.bf16.mxu0 0
    %144 = vmatpush1.bf16.msra.mxu0 0
    %145 = vmatprep.subr.bf16.mxu0 0
    %146 = vmatpush1.bf16.msra.mxu0 0
    %147 = vmatprep.subr.bf16.mxu0 0
    %148 = vmatpush1.bf16.msra.mxu0 0
    %149 = vmatprep.subr.bf16.mxu0 0
    %150 = vmatpush1.bf16.msra.mxu0 0
    %151 = vmatprep.subr.bf16.mxu0 0
    %152 = vmatpush1.bf16.msra.mxu0 0
    %153 = vmatprep.subr.bf16.mxu0 0
    %154 = vmatpush1.bf16.msra.mxu0 0
    %155 = vmatprep.subr.bf16.mxu0 0
    %156 = vmatpush1.bf16.msra.mxu0 0
    %157 = vmatprep.subr.bf16.mxu0 %v135
    %158 = vmatpush1.bf16.msra.mxu0 %v132
    %159 = vmatprep.subr.bf16.mxu0 0
    %160 = vmatpush2.bf16.msra.mxu0 0
    %161 = vmatprep.subr.bf16.mxu0 0
    %162 = vmatpush2.bf16.msra.mxu0 0
    %163 = vmatprep.subr.bf16.mxu0 0
    %164 = vmatpush2.bf16.msra.mxu0 0
    %165 = vmatprep.subr.bf16.mxu0 0
    %166 = vmatpush2.bf16.msra.mxu0 0
    %167 = vmatprep.subr.bf16.mxu0 0
    %168 = vmatpush2.bf16.msra.mxu0 0
    %169 = vmatprep.subr.bf16.mxu0 0
    %170 = vmatpush2.bf16.msra.mxu0 0
    %171 = vmatprep.subr.bf16.mxu0 0
    %172 = vmatpush2.bf16.msra.mxu0 0
    %173 = vmatprep.subr.bf16.mxu0 0
    %174 = vmatpush2.bf16.msra.mxu0 0
    %175 = vmatprep.mubr.bf16.mxu0 0
    %176 = vmatmul.mubr.bf16.gmra.mxu0 %v128
    %v177 = vpop.f32.mrf.mxu0
    %v178 = vadd.f32 %v99, %v177
    %v179 = vpop.f32.mrf.mxu0
    %v180 = vadd.f32 %v103, %v179
    %v181 = vpop.f32.mrf.mxu0
    %v182 = vpop.f32.mrf.mxu0
    %183 = vdwg.mxu0
    %184 = vmatprep.subr.bf16.mxu0 0
    %185 = vmatpush1.bf16.msra.mxu0 0
    %186 = vmatprep.subr.bf16.mxu0 0
    %187 = vmatpush1.bf16.msra.mxu0 0
    %188 = vmatprep.subr.bf16.mxu0 0
    %189 = vmatpush1.bf16.msra.mxu0 0
    %190 = vmatprep.subr.bf16.mxu0 0
    %191 = vmatpush1.bf16.msra.mxu0 0
    %192 = vmatprep.subr.bf16.mxu0 0
    %193 = vmatpush1.bf16.msra.mxu0 0
    %194 = vmatprep.subr.bf16.mxu0 0
    %195 = vmatpush1.bf16.msra.mxu0 0
    %196 = vmatprep.subr.bf16.mxu0 0
    %197 = vmatpush1.bf16.msra.mxu0 0
    %198 = vmatprep.subr.bf16.mxu0 %v141
    %199 = vmatpush1.bf16.msra.mxu0 %v138
    %200 = vmatprep.subr.bf16.mxu0 0
    %201 = vmatpush2.bf16.msra.mxu0 0
    %202 = vmatprep.subr.bf16.mxu0 0
    %203 = vmatpush2.bf16.msra.mxu0 0
    %204 = vmatprep.subr.bf16.mxu0 0
    %205 = vmatpush2.bf16.msra.mxu0 0
    %206 = vmatprep.subr.bf16.mxu0 0
    %207 = vmatpush2.bf16.msra.mxu0 0
    %208 = vmatprep.subr.bf16.mxu0 0
    %209 = vmatpush2.bf16.msra.mxu0 0
    %210 = vmatprep.subr.bf16.mxu0 0
    %211 = vmatpush2.bf16.msra.mxu0 0
    %212 = vmatprep.subr.bf16.mxu0 0
    %213 = vmatpush2.bf16.msra.mxu0 0
    %214 = vmatprep.subr.bf16.mxu0 0
    %215 = vmatpush2.bf16.msra.mxu0 0
    %216 = vmatprep.mubr.bf16.mxu0 0
    %217 = vmatmul.mubr.bf16.gmra.mxu0 %v128
    %v218 = vpop.f32.mrf.mxu0
    %v219 = vadd.f32 %v107, %v218
    %v220 = vpop.f32.mrf.mxu0
    %v221 = vadd.f32 %v111, %v220
    %v222 = vpop.f32.mrf.mxu0
    %v223 = vpop.f32.mrf.mxu0
    %224 = vdwg.mxu0
    %v225 = vmax.f32 %v178, 0.0
    %v226 = vmax.f32 %v180, 0.0
    %v227 = vmax.f32 %v219, 0.0
    %v228 = vmax.f32 %v221, 0.0
    %v229 = vpack.c.bf16 %v225, %v225
    %v230 = vpack.c.bf16 %v226, %v226
    %v231 = vpack.c.bf16 %v227, %v227
    %v232 = vpack.c.bf16 %v228, %v228
    %v233 = vld [vmem:[#allocation8] sm:$0xff]
    %v234 = vld [vmem:[#allocation8 + $0x8] sm:$0xff]
    %v235 = vld [vmem:[#allocation8 + $0x10] sm:$0xff]
    %v236 = vld [vmem:[#allocation8 + $0x18] sm:$0xff]
    %v237 = vld [vmem:[#allocation8 + $0x20] sm:$0xff]
    %v238 = vld [vmem:[#allocation8 + $0x28] sm:$0xff]
    %v239 = vld [vmem:[#allocation8 + $0x30] sm:$0xff]
    %v240 = vld [vmem:[#allocation8 + $0x38] sm:$0xff]
    %v241 = vld [vmem:[#allocation8 + $0x40] sm:$0xff]
    %v242 = vld [vmem:[#allocation8 + $0x48] sm:$0xff]
    %v243 = vld [vmem:[#allocation8 + $0x50] sm:$0xff]
    %v244 = vld [vmem:[#allocation8 + $0x58] sm:$0xff]
    %v245 = vld [vmem:[#allocation8 + $0x60] sm:$0xff]
    %v246 = vld [vmem:[#allocation8 + $0x68] sm:$0xff]
    %v247 = vld [vmem:[#allocation8 + $0x70] sm:$0xff]
    %v248 = vld [vmem:[#allocation8 + $0x78] sm:$0xff]
    %v249 = vld [vmem:[#allocation8 + $0x80] sm:$0xff]
    %v250 = vld [vmem:[#allocation8 + $0x88] sm:$0xff]
    %v251 = vld [vmem:[#allocation8 + $0x90] sm:$0xff]
    %v252 = vld [vmem:[#allocation8 + $0x98] sm:$0xff]
    %v253 = vld [vmem:[#allocation8 + $0xa0] sm:$0xff]
    %v254 = vld [vmem:[#allocation8 + $0xa8] sm:$0xff]
    %v255 = vld [vmem:[#allocation8 + $0xb0] sm:$0xff]
    %v256 = vld [vmem:[#allocation8 + $0xb8] sm:$0xff]
    %v257 = vld [vmem:[#allocation8 + $0xc0] sm:$0xff]
    %v258 = vld [vmem:[#allocation8 + $0xc8] sm:$0xff]
    %v259 = vld [vmem:[#allocation8 + $0xd0] sm:$0xff]
    %v260 = vld [vmem:[#allocation8 + $0xd8] sm:$0xff]
    %v261 = vld [vmem:[#allocation8 + $0xe0] sm:$0xff]
    %v262 = vld [vmem:[#allocation8 + $0xe8] sm:$0xff]
    %v263 = vld [vmem:[#allocation8 + $0xf0] sm:$0xff]
    %v264 = vld [vmem:[#allocation8 + $0xf8] sm:$0xff]
    %v265 = vld [vmem:[#allocation8 + $0x100] sm:$0xff]
    %v266 = vld [vmem:[#allocation8 + $0x108] sm:$0xff]
    %v267 = vld [vmem:[#allocation8 + $0x110] sm:$0xff]
    %v268 = vld [vmem:[#allocation8 + $0x118] sm:$0xff]
    %v269 = vld [vmem:[#allocation8 + $0x120] sm:$0xff]
    %v270 = vld [vmem:[#allocation8 + $0x128] sm:$0xff]
    %v271 = vld [vmem:[#allocation8 + $0x130] sm:$0xff]
    %v272 = vld [vmem:[#allocation8 + $0x138] sm:$0xff]
    %v273 = vld [vmem:[#allocation8 + $0x140] sm:$0xff]
    %v274 = vld [vmem:[#allocation8 + $0x148] sm:$0xff]
    %v275 = vld [vmem:[#allocation8 + $0x150] sm:$0xff]
    %v276 = vld [vmem:[#allocation8 + $0x158] sm:$0xff]
    %v277 = vld [vmem:[#allocation8 + $0x160] sm:$0xff]
    %v278 = vld [vmem:[#allocation8 + $0x168] sm:$0xff]
    %v279 = vld [vmem:[#allocation8 + $0x170] sm:$0xff]
    %v280 = vld [vmem:[#allocation8 + $0x178] sm:$0xff]
    %v281 = vld [vmem:[#allocation8 + $0x180] sm:$0xff]
    %v282 = vld [vmem:[#allocation8 + $0x188] sm:$0xff]
    %v283 = vld [vmem:[#allocation8 + $0x190] sm:$0xff]
    %v284 = vld [vmem:[#allocation8 + $0x198] sm:$0xff]
    %v285 = vld [vmem:[#allocation8 + $0x1a0] sm:$0xff]
    %v286 = vld [vmem:[#allocation8 + $0x1a8] sm:$0xff]
    %v287 = vld [vmem:[#allocation8 + $0x1b0] sm:$0xff]
    %v288 = vld [vmem:[#allocation8 + $0x1b8] sm:$0xff]
    %v289 = vld [vmem:[#allocation8 + $0x1c0] sm:$0xff]
    %v290 = vld [vmem:[#allocation8 + $0x1c8] sm:$0xff]
    %v291 = vld [vmem:[#allocation8 + $0x1d0] sm:$0xff]
    %v292 = vld [vmem:[#allocation8 + $0x1d8] sm:$0xff]
    %v293 = vld [vmem:[#allocation8 + $0x1e0] sm:$0xff]
    %v294 = vld [vmem:[#allocation8 + $0x1e8] sm:$0xff]
    %v295 = vld [vmem:[#allocation8 + $0x1f0] sm:$0xff]
    %v296 = vld [vmem:[#allocation8 + $0x1f8] sm:$0xff]
    %v297 = vld [vmem:[#allocation8 + $0x200] sm:$0xff]
    %v298 = vld [vmem:[#allocation8 + $0x208] sm:$0xff]
    %v299 = vld [vmem:[#allocation8 + $0x210] sm:$0xff]
    %v300 = vld [vmem:[#allocation8 + $0x218] sm:$0xff]
    %v301 = vld [vmem:[#allocation8 + $0x220] sm:$0xff]
    %v302 = vld [vmem:[#allocation8 + $0x228] sm:$0xff]
    %v303 = vld [vmem:[#allocation8 + $0x230] sm:$0xff]
    %v304 = vld [vmem:[#allocation8 + $0x238] sm:$0xff]
    %v305 = vld [vmem:[#allocation8 + $0x240] sm:$0xff]
    %v306 = vld [vmem:[#allocation8 + $0x248] sm:$0xff]
    %v307 = vld [vmem:[#allocation8 + $0x250] sm:$0xff]
    %v308 = vld [vmem:[#allocation8 + $0x258] sm:$0xff]
    %v309 = vld [vmem:[#allocation8 + $0x260] sm:$0xff]
    %v310 = vld [vmem:[#allocation8 + $0x268] sm:$0xff]
    %v311 = vld [vmem:[#allocation8 + $0x270] sm:$0xff]
    %v312 = vld [vmem:[#allocation8 + $0x278] sm:$0xff]
    %v313 = vld [vmem:[#allocation8 + $0x280] sm:$0xff]
    %v314 = vld [vmem:[#allocation8 + $0x288] sm:$0xff]
    %v315 = vld [vmem:[#allocation8 + $0x290] sm:$0xff]
    %v316 = vld [vmem:[#allocation8 + $0x298] sm:$0xff]
    %v317 = vld [vmem:[#allocation8 + $0x2a0] sm:$0xff]
    %v318 = vld [vmem:[#allocation8 + $0x2a8] sm:$0xff]
    %v319 = vld [vmem:[#allocation8 + $0x2b0] sm:$0xff]
    %v320 = vld [vmem:[#allocation8 + $0x2b8] sm:$0xff]
    %v321 = vld [vmem:[#allocation8 + $0x2c0] sm:$0xff]
    %v322 = vld [vmem:[#allocation8 + $0x2c8] sm:$0xff]
    %v323 = vld [vmem:[#allocation8 + $0x2d0] sm:$0xff]
    %v324 = vld [vmem:[#allocation8 + $0x2d8] sm:$0xff]
    %v325 = vld [vmem:[#allocation8 + $0x2e0] sm:$0xff]
    %v326 = vld [vmem:[#allocation8 + $0x2e8] sm:$0xff]
    %v327 = vld [vmem:[#allocation8 + $0x2f0] sm:$0xff]
    %v328 = vld [vmem:[#allocation8 + $0x2f8] sm:$0xff]
    %v329 = vld [vmem:[#allocation8 + $0x300] sm:$0xff]
    %v330 = vld [vmem:[#allocation8 + $0x308] sm:$0xff]
    %v331 = vld [vmem:[#allocation8 + $0x310] sm:$0xff]
    %v332 = vld [vmem:[#allocation8 + $0x318] sm:$0xff]
    %v333 = vld [vmem:[#allocation8 + $0x320] sm:$0xff]
    %v334 = vld [vmem:[#allocation8 + $0x328] sm:$0xff]
    %v335 = vld [vmem:[#allocation8 + $0x330] sm:$0xff]
    %v336 = vld [vmem:[#allocation8 + $0x338] sm:$0xff]
    %v337 = vld [vmem:[#allocation8 + $0x340] sm:$0xff]
    %v338 = vld [vmem:[#allocation8 + $0x348] sm:$0xff]
    %v339 = vld [vmem:[#allocation8 + $0x350] sm:$0xff]
    %v340 = vld [vmem:[#allocation8 + $0x358] sm:$0xff]
    %v341 = vld [vmem:[#allocation8 + $0x360] sm:$0xff]
    %v342 = vld [vmem:[#allocation8 + $0x368] sm:$0xff]
    %v343 = vld [vmem:[#allocation8 + $0x370] sm:$0xff]
    %v344 = vld [vmem:[#allocation8 + $0x378] sm:$0xff]
    %v345 = vld [vmem:[#allocation8 + $0x380] sm:$0xff]
    %v346 = vld [vmem:[#allocation8 + $0x388] sm:$0xff]
    %v347 = vld [vmem:[#allocation8 + $0x390] sm:$0xff]
    %v348 = vld [vmem:[#allocation8 + $0x398] sm:$0xff]
    %v349 = vld [vmem:[#allocation8 + $0x3a0] sm:$0xff]
    %v350 = vld [vmem:[#allocation8 + $0x3a8] sm:$0xff]
    %v351 = vld [vmem:[#allocation8 + $0x3b0] sm:$0xff]
    %v352 = vld [vmem:[#allocation8 + $0x3b8] sm:$0xff]
    %v353 = vld [vmem:[#allocation8 + $0x3c0] sm:$0xff]
    %v354 = vld [vmem:[#allocation8 + $0x3c8] sm:$0xff]
    %v355 = vld [vmem:[#allocation8 + $0x3d0] sm:$0xff]
    %v356 = vld [vmem:[#allocation8 + $0x3d8] sm:$0xff]
    %v357 = vld [vmem:[#allocation8 + $0x3e0] sm:$0xff]
    %v358 = vld [vmem:[#allocation8 + $0x3e8] sm:$0xff]
    %v359 = vld [vmem:[#allocation8 + $0x3f0] sm:$0xff]
    %v360 = vld [vmem:[#allocation8 + $0x3f8] sm:$0xff]
    %v361 = vld [vmem:[%s4] sm:$0xf]
    %v363 = vlaneseq
    %v364 = vshrl.u32 %v363, 7
    %v365 = vsub.s32 0, %v364
    %v366 = vrot.slane %v361, %v365
    %v367 = vlaneseq
    %v368 = vshrl.u32 %v367, 7
    %v369 = vsub.s32 1, %v368
    %v370 = vrot.slane %v361, %v369
    %v371 = vlaneseq
    %v372 = vshrl.u32 %v371, 7
    %v373 = vsub.s32 2, %v372
    %v374 = vrot.slane %v361, %v373
    %v375 = vlaneseq
    %v376 = vshrl.u32 %v375, 7
    %v377 = vsub.s32 3, %v376
    %v378 = vrot.slane %v361, %v377
    %v511 = vunpack.c.l.b16 %v233
    %v512 = vunpack.c.h.b16 %v233
    %v513 = vunpack.c.l.b16 %v234
    %v514 = vunpack.c.h.b16 %v234
    %v515 = vunpack.c.l.b16 %v235
    %v516 = vunpack.c.h.b16 %v235
    %v517 = vunpack.c.l.b16 %v236
    %v518 = vunpack.c.h.b16 %v236
    %v519 = vunpack.c.l.b16 %v237
    %v520 = vunpack.c.h.b16 %v237
    %v521 = vunpack.c.l.b16 %v238
    %v522 = vunpack.c.h.b16 %v238
    %v523 = vunpack.c.l.b16 %v239
    %v524 = vunpack.c.h.b16 %v239
    %v525 = vunpack.c.l.b16 %v240
    %v526 = vunpack.c.h.b16 %v240
    %v527 = vunpack.c.l.b16 %v241
    %v528 = vunpack.c.h.b16 %v241
    %v529 = vunpack.c.l.b16 %v242
    %v530 = vunpack.c.h.b16 %v242
    %v531 = vunpack.c.l.b16 %v243
    %v532 = vunpack.c.h.b16 %v243
    %v533 = vunpack.c.l.b16 %v244
    %v534 = vunpack.c.h.b16 %v244
    %v535 = vunpack.c.l.b16 %v245
    %v536 = vunpack.c.h.b16 %v245
    %v537 = vunpack.c.l.b16 %v246
    %v538 = vunpack.c.h.b16 %v246
    %v539 = vunpack.c.l.b16 %v247
    %v540 = vunpack.c.h.b16 %v247
    %v541 = vunpack.c.l.b16 %v248
    %v542 = vunpack.c.h.b16 %v248
    %v543 = vunpack.c.l.b16 %v249
    %v544 = vunpack.c.h.b16 %v249
    %v545 = vunpack.c.l.b16 %v250
    %v546 = vunpack.c.h.b16 %v250
    %v547 = vunpack.c.l.b16 %v251
    %v548 = vunpack.c.h.b16 %v251
    %v549 = vunpack.c.l.b16 %v252
    %v550 = vunpack.c.h.b16 %v252
    %v551 = vunpack.c.l.b16 %v253
    %v552 = vunpack.c.h.b16 %v253
    %v553 = vunpack.c.l.b16 %v254
    %v554 = vunpack.c.h.b16 %v254
    %v555 = vunpack.c.l.b16 %v255
    %v556 = vunpack.c.h.b16 %v255
    %v557 = vunpack.c.l.b16 %v256
    %v558 = vunpack.c.h.b16 %v256
    %v559 = vunpack.c.l.b16 %v257
    %v560 = vunpack.c.h.b16 %v257
    %v561 = vunpack.c.l.b16 %v258
    %v562 = vunpack.c.h.b16 %v258
    %v563 = vunpack.c.l.b16 %v259
    %v564 = vunpack.c.h.b16 %v259
    %v565 = vunpack.c.l.b16 %v260
    %v566 = vunpack.c.h.b16 %v260
    %v567 = vunpack.c.l.b16 %v261
    %v568 = vunpack.c.h.b16 %v261
    %v569 = vunpack.c.l.b16 %v262
    %v570 = vunpack.c.h.b16 %v262
    %v571 = vunpack.c.l.b16 %v263
    %v572 = vunpack.c.h.b16 %v263
    %v573 = vunpack.c.l.b16 %v264
    %v574 = vunpack.c.h.b16 %v264
    %v575 = vunpack.c.l.b16 %v265
    %v576 = vunpack.c.h.b16 %v265
    %v577 = vunpack.c.l.b16 %v266
    %v578 = vunpack.c.h.b16 %v266
    %v579 = vunpack.c.l.b16 %v267
    %v580 = vunpack.c.h.b16 %v267
    %v581 = vunpack.c.l.b16 %v268
    %v582 = vunpack.c.h.b16 %v268
    %v583 = vunpack.c.l.b16 %v269
    %v584 = vunpack.c.h.b16 %v269
    %v585 = vunpack.c.l.b16 %v270
    %v586 = vunpack.c.h.b16 %v270
    %v587 = vunpack.c.l.b16 %v271
    %v588 = vunpack.c.h.b16 %v271
    %v589 = vunpack.c.l.b16 %v272
    %v590 = vunpack.c.h.b16 %v272
    %v591 = vunpack.c.l.b16 %v273
    %v592 = vunpack.c.h.b16 %v273
    %v593 = vunpack.c.l.b16 %v274
    %v594 = vunpack.c.h.b16 %v274
    %v595 = vunpack.c.l.b16 %v275
    %v596 = vunpack.c.h.b16 %v275
    %v597 = vunpack.c.l.b16 %v276
    %v598 = vunpack.c.h.b16 %v276
    %v599 = vunpack.c.l.b16 %v277
    %v600 = vunpack.c.h.b16 %v277
    %v601 = vunpack.c.l.b16 %v278
    %v602 = vunpack.c.h.b16 %v278
    %v603 = vunpack.c.l.b16 %v279
    %v604 = vunpack.c.h.b16 %v279
    %v605 = vunpack.c.l.b16 %v280
    %v606 = vunpack.c.h.b16 %v280
    %v607 = vunpack.c.l.b16 %v281
    %v608 = vunpack.c.h.b16 %v281
    %v609 = vunpack.c.l.b16 %v282
    %v610 = vunpack.c.h.b16 %v282
    %v611 = vunpack.c.l.b16 %v283
    %v612 = vunpack.c.h.b16 %v283
    %v613 = vunpack.c.l.b16 %v284
    %v614 = vunpack.c.h.b16 %v284
    %v615 = vunpack.c.l.b16 %v285
    %v616 = vunpack.c.h.b16 %v285
    %v617 = vunpack.c.l.b16 %v286
    %v618 = vunpack.c.h.b16 %v286
    %v619 = vunpack.c.l.b16 %v287
    %v620 = vunpack.c.h.b16 %v287
    %v621 = vunpack.c.l.b16 %v288
    %v622 = vunpack.c.h.b16 %v288
    %v623 = vunpack.c.l.b16 %v289
    %v624 = vunpack.c.h.b16 %v289
    %v625 = vunpack.c.l.b16 %v290
    %v626 = vunpack.c.h.b16 %v290
    %v627 = vunpack.c.l.b16 %v291
    %v628 = vunpack.c.h.b16 %v291
    %v629 = vunpack.c.l.b16 %v292
    %v630 = vunpack.c.h.b16 %v292
    %v631 = vunpack.c.l.b16 %v293
    %v632 = vunpack.c.h.b16 %v293
    %v633 = vunpack.c.l.b16 %v294
    %v634 = vunpack.c.h.b16 %v294
    %v635 = vunpack.c.l.b16 %v295
    %v636 = vunpack.c.h.b16 %v295
    %v637 = vunpack.c.l.b16 %v296
    %v638 = vunpack.c.h.b16 %v296
    %v639 = vunpack.c.l.b16 %v297
    %v640 = vunpack.c.h.b16 %v297
    %v641 = vunpack.c.l.b16 %v298
    %v642 = vunpack.c.h.b16 %v298
    %v643 = vunpack.c.l.b16 %v299
    %v644 = vunpack.c.h.b16 %v299
    %v645 = vunpack.c.l.b16 %v300
    %v646 = vunpack.c.h.b16 %v300
    %v647 = vunpack.c.l.b16 %v301
    %v648 = vunpack.c.h.b16 %v301
    %v649 = vunpack.c.l.b16 %v302
    %v650 = vunpack.c.h.b16 %v302
    %v651 = vunpack.c.l.b16 %v303
    %v652 = vunpack.c.h.b16 %v303
    %v653 = vunpack.c.l.b16 %v304
    %v654 = vunpack.c.h.b16 %v304
    %v655 = vunpack.c.l.b16 %v305
    %v656 = vunpack.c.h.b16 %v305
    %v657 = vunpack.c.l.b16 %v306
    %v658 = vunpack.c.h.b16 %v306
    %v659 = vunpack.c.l.b16 %v307
    %v660 = vunpack.c.h.b16 %v307
    %v661 = vunpack.c.l.b16 %v308
    %v662 = vunpack.c.h.b16 %v308
    %v663 = vunpack.c.l.b16 %v309
    %v664 = vunpack.c.h.b16 %v309
    %v665 = vunpack.c.l.b16 %v310
    %v666 = vunpack.c.h.b16 %v310
    %v667 = vunpack.c.l.b16 %v311
    %v668 = vunpack.c.h.b16 %v311
    %v669 = vunpack.c.l.b16 %v312
    %v670 = vunpack.c.h.b16 %v312
    %v671 = vunpack.c.l.b16 %v313
    %v672 = vunpack.c.h.b16 %v313
    %v673 = vunpack.c.l.b16 %v314
    %v674 = vunpack.c.h.b16 %v314
    %v675 = vunpack.c.l.b16 %v315
    %v676 = vunpack.c.h.b16 %v315
    %v677 = vunpack.c.l.b16 %v316
    %v678 = vunpack.c.h.b16 %v316
    %v679 = vunpack.c.l.b16 %v317
    %v680 = vunpack.c.h.b16 %v317
    %v681 = vunpack.c.l.b16 %v318
    %v682 = vunpack.c.h.b16 %v318
    %v683 = vunpack.c.l.b16 %v319
    %v684 = vunpack.c.h.b16 %v319
    %v685 = vunpack.c.l.b16 %v320
    %v686 = vunpack.c.h.b16 %v320
    %v687 = vunpack.c.l.b16 %v321
    %v688 = vunpack.c.h.b16 %v321
    %v689 = vunpack.c.l.b16 %v322
    %v690 = vunpack.c.h.b16 %v322
    %v691 = vunpack.c.l.b16 %v323
    %v692 = vunpack.c.h.b16 %v323
    %v693 = vunpack.c.l.b16 %v324
    %v694 = vunpack.c.h.b16 %v324
    %v695 = vunpack.c.l.b16 %v325
    %v696 = vunpack.c.h.b16 %v325
    %v697 = vunpack.c.l.b16 %v326
    %v698 = vunpack.c.h.b16 %v326
    %v699 = vunpack.c.l.b16 %v327
    %v700 = vunpack.c.h.b16 %v327
    %v701 = vunpack.c.l.b16 %v328
    %v702 = vunpack.c.h.b16 %v328
    %v703 = vunpack.c.l.b16 %v329
    %v704 = vunpack.c.h.b16 %v329
    %v705 = vunpack.c.l.b16 %v330
    %v706 = vunpack.c.h.b16 %v330
    %v707 = vunpack.c.l.b16 %v331
    %v708 = vunpack.c.h.b16 %v331
    %v709 = vunpack.c.l.b16 %v332
    %v710 = vunpack.c.h.b16 %v332
    %v711 = vunpack.c.l.b16 %v333
    %v712 = vunpack.c.h.b16 %v333
    %v713 = vunpack.c.l.b16 %v334
    %v714 = vunpack.c.h.b16 %v334
    %v715 = vunpack.c.l.b16 %v335
    %v716 = vunpack.c.h.b16 %v335
    %v717 = vunpack.c.l.b16 %v336
    %v718 = vunpack.c.h.b16 %v336
    %v719 = vunpack.c.l.b16 %v337
    %v720 = vunpack.c.h.b16 %v337
    %v721 = vunpack.c.l.b16 %v338
    %v722 = vunpack.c.h.b16 %v338
    %v723 = vunpack.c.l.b16 %v339
    %v724 = vunpack.c.h.b16 %v339
    %v725 = vunpack.c.l.b16 %v340
    %v726 = vunpack.c.h.b16 %v340
    %v727 = vunpack.c.l.b16 %v341
    %v728 = vunpack.c.h.b16 %v341
    %v729 = vunpack.c.l.b16 %v342
    %v730 = vunpack.c.h.b16 %v342
    %v731 = vunpack.c.l.b16 %v343
    %v732 = vunpack.c.h.b16 %v343
    %v733 = vunpack.c.l.b16 %v344
    %v734 = vunpack.c.h.b16 %v344
    %v735 = vunpack.c.l.b16 %v345
    %v736 = vunpack.c.h.b16 %v345
    %v737 = vunpack.c.l.b16 %v346
    %v738 = vunpack.c.h.b16 %v346
    %v739 = vunpack.c.l.b16 %v347
    %v740 = vunpack.c.h.b16 %v347
    %v741 = vunpack.c.l.b16 %v348
    %v742 = vunpack.c.h.b16 %v348
    %v743 = vunpack.c.l.b16 %v349
    %v744 = vunpack.c.h.b16 %v349
    %v745 = vunpack.c.l.b16 %v350
    %v746 = vunpack.c.h.b16 %v350
    %v747 = vunpack.c.l.b16 %v351
    %v748 = vunpack.c.h.b16 %v351
    %v749 = vunpack.c.l.b16 %v352
    %v750 = vunpack.c.h.b16 %v352
    %v751 = vunpack.c.l.b16 %v353
    %v752 = vunpack.c.h.b16 %v353
    %v753 = vunpack.c.l.b16 %v354
    %v754 = vunpack.c.h.b16 %v354
    %v755 = vunpack.c.l.b16 %v355
    %v756 = vunpack.c.h.b16 %v355
    %v757 = vunpack.c.l.b16 %v356
    %v758 = vunpack.c.h.b16 %v356
    %v759 = vunpack.c.l.b16 %v357
    %v760 = vunpack.c.h.b16 %v357
    %v761 = vunpack.c.l.b16 %v358
    %v762 = vunpack.c.h.b16 %v358
    %v763 = vunpack.c.l.b16 %v359
    %v764 = vunpack.c.h.b16 %v359
    %v765 = vunpack.c.l.b16 %v360
    %v766 = vunpack.c.h.b16 %v360
    %v767 = vpack.c.b16 %v515, %v511
    %v768 = vpack.c.b16 %v516, %v512
    %v769 = vpack.c.b16 %v517, %v513
    %v770 = vpack.c.b16 %v518, %v514
    %v771 = vpack.c.b16 %v523, %v519
    %v772 = vpack.c.b16 %v524, %v520
    %v773 = vpack.c.b16 %v525, %v521
    %v774 = vpack.c.b16 %v526, %v522
    %v775 = vpack.c.b16 %v531, %v527
    %v776 = vpack.c.b16 %v532, %v528
    %v777 = vpack.c.b16 %v533, %v529
    %v778 = vpack.c.b16 %v534, %v530
    %v779 = vpack.c.b16 %v539, %v535
    %v780 = vpack.c.b16 %v540, %v536
    %v781 = vpack.c.b16 %v541, %v537
    %v782 = vpack.c.b16 %v542, %v538
    %v783 = vpack.c.b16 %v547, %v543
    %v784 = vpack.c.b16 %v548, %v544
    %v785 = vpack.c.b16 %v549, %v545
    %v786 = vpack.c.b16 %v550, %v546
    %v787 = vpack.c.b16 %v555, %v551
    %v788 = vpack.c.b16 %v556, %v552
    %v789 = vpack.c.b16 %v557, %v553
    %v790 = vpack.c.b16 %v558, %v554
    %v791 = vpack.c.b16 %v563, %v559
    %v792 = vpack.c.b16 %v564, %v560
    %v793 = vpack.c.b16 %v565, %v561
    %v794 = vpack.c.b16 %v566, %v562
    %v795 = vpack.c.b16 %v571, %v567
    %v796 = vpack.c.b16 %v572, %v568
    %v797 = vpack.c.b16 %v573, %v569
    %v798 = vpack.c.b16 %v574, %v570
    %v799 = vpack.c.b16 %v579, %v575
    %v800 = vpack.c.b16 %v580, %v576
    %v801 = vpack.c.b16 %v581, %v577
    %v802 = vpack.c.b16 %v582, %v578
    %v803 = vpack.c.b16 %v587, %v583
    %v804 = vpack.c.b16 %v588, %v584
    %v805 = vpack.c.b16 %v589, %v585
    %v806 = vpack.c.b16 %v590, %v586
    %v807 = vpack.c.b16 %v595, %v591
    %v808 = vpack.c.b16 %v596, %v592
    %v809 = vpack.c.b16 %v597, %v593
    %v810 = vpack.c.b16 %v598, %v594
    %v811 = vpack.c.b16 %v603, %v599
    %v812 = vpack.c.b16 %v604, %v600
    %v813 = vpack.c.b16 %v605, %v601
    %v814 = vpack.c.b16 %v606, %v602
    %v815 = vpack.c.b16 %v611, %v607
    %v816 = vpack.c.b16 %v612, %v608
    %v817 = vpack.c.b16 %v613, %v609
    %v818 = vpack.c.b16 %v614, %v610
    %v819 = vpack.c.b16 %v619, %v615
    %v820 = vpack.c.b16 %v620, %v616
    %v821 = vpack.c.b16 %v621, %v617
    %v822 = vpack.c.b16 %v622, %v618
    %v823 = vpack.c.b16 %v627, %v623
    %v824 = vpack.c.b16 %v628, %v624
    %v825 = vpack.c.b16 %v629, %v625
    %v826 = vpack.c.b16 %v630, %v626
    %v827 = vpack.c.b16 %v635, %v631
    %v828 = vpack.c.b16 %v636, %v632
    %v829 = vpack.c.b16 %v637, %v633
    %v830 = vpack.c.b16 %v638, %v634
    %v831 = vpack.c.b16 %v643, %v639
    %v832 = vpack.c.b16 %v644, %v640
    %v833 = vpack.c.b16 %v645, %v641
    %v834 = vpack.c.b16 %v646, %v642
    %v835 = vpack.c.b16 %v651, %v647
    %v836 = vpack.c.b16 %v652, %v648
    %v837 = vpack.c.b16 %v653, %v649
    %v838 = vpack.c.b16 %v654, %v650
    %v839 = vpack.c.b16 %v659, %v655
    %v840 = vpack.c.b16 %v660, %v656
    %v841 = vpack.c.b16 %v661, %v657
    %v842 = vpack.c.b16 %v662, %v658
    %v843 = vpack.c.b16 %v667, %v663
    %v844 = vpack.c.b16 %v668, %v664
    %v845 = vpack.c.b16 %v669, %v665
    %v846 = vpack.c.b16 %v670, %v666
    %v847 = vpack.c.b16 %v675, %v671
    %v848 = vpack.c.b16 %v676, %v672
    %v849 = vpack.c.b16 %v677, %v673
    %v850 = vpack.c.b16 %v678, %v674
    %v851 = vpack.c.b16 %v683, %v679
    %v852 = vpack.c.b16 %v684, %v680
    %v853 = vpack.c.b16 %v685, %v681
    %v854 = vpack.c.b16 %v686, %v682
    %v855 = vpack.c.b16 %v691, %v687
    %v856 = vpack.c.b16 %v692, %v688
    %v857 = vpack.c.b16 %v693, %v689
    %v858 = vpack.c.b16 %v694, %v690
    %v859 = vpack.c.b16 %v699, %v695
    %v860 = vpack.c.b16 %v700, %v696
    %v861 = vpack.c.b16 %v701, %v697
    %v862 = vpack.c.b16 %v702, %v698
    %v863 = vpack.c.b16 %v707, %v703
    %v864 = vpack.c.b16 %v708, %v704
    %v865 = vpack.c.b16 %v709, %v705
    %v866 = vpack.c.b16 %v710, %v706
    %v867 = vpack.c.b16 %v715, %v711
    %v868 = vpack.c.b16 %v716, %v712
    %v869 = vpack.c.b16 %v717, %v713
    %v870 = vpack.c.b16 %v718, %v714
    %v871 = vpack.c.b16 %v723, %v719
    %v872 = vpack.c.b16 %v724, %v720
    %v873 = vpack.c.b16 %v725, %v721
    %v874 = vpack.c.b16 %v726, %v722
    %v875 = vpack.c.b16 %v731, %v727
    %v876 = vpack.c.b16 %v732, %v728
    %v877 = vpack.c.b16 %v733, %v729
    %v878 = vpack.c.b16 %v734, %v730
    %v879 = vpack.c.b16 %v739, %v735
    %v880 = vpack.c.b16 %v740, %v736
    %v881 = vpack.c.b16 %v741, %v737
    %v882 = vpack.c.b16 %v742, %v738
    %v883 = vpack.c.b16 %v747, %v743
    %v884 = vpack.c.b16 %v748, %v744
    %v885 = vpack.c.b16 %v749, %v745
    %v886 = vpack.c.b16 %v750, %v746
    %v887 = vpack.c.b16 %v755, %v751
    %v888 = vpack.c.b16 %v756, %v752
    %v889 = vpack.c.b16 %v757, %v753
    %v890 = vpack.c.b16 %v758, %v754
    %v891 = vpack.c.b16 %v763, %v759
    %v892 = vpack.c.b16 %v764, %v760
    %v893 = vpack.c.b16 %v765, %v761
    %v894 = vpack.c.b16 %v766, %v762
    %1023 = vmatprep.subr.bf16.mxu0 %v796
    %1024 = vmatpush1.bf16.msra.mxu0 %v795
    %1025 = vmatprep.subr.bf16.mxu0 %v792
    %1026 = vmatpush1.bf16.msra.mxu0 %v791
    %1027 = vmatprep.subr.bf16.mxu0 %v788
    %1028 = vmatpush1.bf16.msra.mxu0 %v787
    %1029 = vmatprep.subr.bf16.mxu0 %v784
    %1030 = vmatpush1.bf16.msra.mxu0 %v783
    %1031 = vmatprep.subr.bf16.mxu0 %v780
    %1032 = vmatpush1.bf16.msra.mxu0 %v779
    %1033 = vmatprep.subr.bf16.mxu0 %v776
    %1034 = vmatpush1.bf16.msra.mxu0 %v775
    %1035 = vmatprep.subr.bf16.mxu0 %v772
    %1036 = vmatpush1.bf16.msra.mxu0 %v771
    %1037 = vmatprep.subr.bf16.mxu0 %v768
    %1038 = vmatpush1.bf16.msra.mxu0 %v767
    %1039 = vmatprep.subr.bf16.mxu0 %v828
    %1040 = vmatpush2.bf16.msra.mxu0 %v827
    %1041 = vmatprep.subr.bf16.mxu0 %v824
    %1042 = vmatpush2.bf16.msra.mxu0 %v823
    %1043 = vmatprep.subr.bf16.mxu0 %v820
    %1044 = vmatpush2.bf16.msra.mxu0 %v819
    %1045 = vmatprep.subr.bf16.mxu0 %v816
    %1046 = vmatpush2.bf16.msra.mxu0 %v815
    %1047 = vmatprep.subr.bf16.mxu0 %v812
    %1048 = vmatpush2.bf16.msra.mxu0 %v811
    %1049 = vmatprep.subr.bf16.mxu0 %v808
    %1050 = vmatpush2.bf16.msra.mxu0 %v807
    %1051 = vmatprep.subr.bf16.mxu0 %v804
    %1052 = vmatpush2.bf16.msra.mxu0 %v803
    %1053 = vmatprep.subr.bf16.mxu0 %v800
    %1054 = vmatpush2.bf16.msra.mxu0 %v799
    %1055 = vmatprep.mubr.bf16.mxu0 %v230
    %1056 = vmatmul.mubr.bf16.gmra.mxu0 %v229
    %v1057 = vpop.f32.mrf.mxu0
    %v1058 = vadd.f32 %v366, %v1057
    %v1059 = vpop.f32.mrf.mxu0
    %v1060 = vadd.f32 %v370, %v1059
    %v1061 = vpop.f32.mrf.mxu0
    %v1062 = vpop.f32.mrf.mxu0
    %1063 = vdwg.mxu0
    %1064 = vmatprep.subr.bf16.mxu0 %v860
    %1065 = vmatpush1.bf16.msra.mxu0 %v859
    %1066 = vmatprep.subr.bf16.mxu0 %v856
    %1067 = vmatpush1.bf16.msra.mxu0 %v855
    %1068 = vmatprep.subr.bf16.mxu0 %v852
    %1069 = vmatpush1.bf16.msra.mxu0 %v851
    %1070 = vmatprep.subr.bf16.mxu0 %v848
    %1071 = vmatpush1.bf16.msra.mxu0 %v847
    %1072 = vmatprep.subr.bf16.mxu0 %v844
    %1073 = vmatpush1.bf16.msra.mxu0 %v843
    %1074 = vmatprep.subr.bf16.mxu0 %v840
    %1075 = vmatpush1.bf16.msra.mxu0 %v839
    %1076 = vmatprep.subr.bf16.mxu0 %v836
    %1077 = vmatpush1.bf16.msra.mxu0 %v835
    %1078 = vmatprep.subr.bf16.mxu0 %v832
    %1079 = vmatpush1.bf16.msra.mxu0 %v831
    %1080 = vmatprep.subr.bf16.mxu0 %v892
    %1081 = vmatpush2.bf16.msra.mxu0 %v891
    %1082 = vmatprep.subr.bf16.mxu0 %v888
    %1083 = vmatpush2.bf16.msra.mxu0 %v887
    %1084 = vmatprep.subr.bf16.mxu0 %v884
    %1085 = vmatpush2.bf16.msra.mxu0 %v883
    %1086 = vmatprep.subr.bf16.mxu0 %v880
    %1087 = vmatpush2.bf16.msra.mxu0 %v879
    %1088 = vmatprep.subr.bf16.mxu0 %v876
    %1089 = vmatpush2.bf16.msra.mxu0 %v875
    %1090 = vmatprep.subr.bf16.mxu0 %v872
    %1091 = vmatpush2.bf16.msra.mxu0 %v871
    %1092 = vmatprep.subr.bf16.mxu0 %v868
    %1093 = vmatpush2.bf16.msra.mxu0 %v867
    %1094 = vmatprep.subr.bf16.mxu0 %v864
    %1095 = vmatpush2.bf16.msra.mxu0 %v863
    %1096 = vmatprep.mubr.bf16.mxu0 %v232
    %1097 = vmatmul.mubr.bf16.gmra.mxu0 %v231
    %v1098 = vpop.f32.mrf.mxu0
    %v1099 = vadd.f32 %v1058, %v1098
    %v1100 = vpop.f32.mrf.mxu0
    %v1101 = vadd.f32 %v1060, %v1100
    %v1102 = vpop.f32.mrf.mxu0
    %v1103 = vpop.f32.mrf.mxu0
    %1104 = vdwg.mxu0
    %1105 = vmatprep.subr.bf16.mxu0 %v798
    %1106 = vmatpush1.bf16.msra.mxu0 %v797
    %1107 = vmatprep.subr.bf16.mxu0 %v794
    %1108 = vmatpush1.bf16.msra.mxu0 %v793
    %1109 = vmatprep.subr.bf16.mxu0 %v790
    %1110 = vmatpush1.bf16.msra.mxu0 %v789
    %1111 = vmatprep.subr.bf16.mxu0 %v786
    %1112 = vmatpush1.bf16.msra.mxu0 %v785
    %1113 = vmatprep.subr.bf16.mxu0 %v782
    %1114 = vmatpush1.bf16.msra.mxu0 %v781
    %1115 = vmatprep.subr.bf16.mxu0 %v778
    %1116 = vmatpush1.bf16.msra.mxu0 %v777
    %1117 = vmatprep.subr.bf16.mxu0 %v774
    %1118 = vmatpush1.bf16.msra.mxu0 %v773
    %1119 = vmatprep.subr.bf16.mxu0 %v770
    %1120 = vmatpush1.bf16.msra.mxu0 %v769
    %1121 = vmatprep.subr.bf16.mxu0 %v830
    %1122 = vmatpush2.bf16.msra.mxu0 %v829
    %1123 = vmatprep.subr.bf16.mxu0 %v826
    %1124 = vmatpush2.bf16.msra.mxu0 %v825
    %1125 = vmatprep.subr.bf16.mxu0 %v822
    %1126 = vmatpush2.bf16.msra.mxu0 %v821
    %1127 = vmatprep.subr.bf16.mxu0 %v818
    %1128 = vmatpush2.bf16.msra.mxu0 %v817
    %1129 = vmatprep.subr.bf16.mxu0 %v814
    %1130 = vmatpush2.bf16.msra.mxu0 %v813
    %1131 = vmatprep.subr.bf16.mxu0 %v810
    %1132 = vmatpush2.bf16.msra.mxu0 %v809
    %1133 = vmatprep.subr.bf16.mxu0 %v806
    %1134 = vmatpush2.bf16.msra.mxu0 %v805
    %1135 = vmatprep.subr.bf16.mxu0 %v802
    %1136 = vmatpush2.bf16.msra.mxu0 %v801
    %1137 = vmatprep.mubr.bf16.mxu0 %v230
    %1138 = vmatmul.mubr.bf16.gmra.mxu0 %v229
    %v1139 = vpop.f32.mrf.mxu0
    %v1140 = vadd.f32 %v374, %v1139
    %v1141 = vpop.f32.mrf.mxu0
    %v1142 = vadd.f32 %v378, %v1141
    %v1143 = vpop.f32.mrf.mxu0
    %v1144 = vpop.f32.mrf.mxu0
    %1145 = vdwg.mxu0
    %1146 = vmatprep.subr.bf16.mxu0 %v862
    %1147 = vmatpush1.bf16.msra.mxu0 %v861
    %1148 = vmatprep.subr.bf16.mxu0 %v858
    %1149 = vmatpush1.bf16.msra.mxu0 %v857
    %1150 = vmatprep.subr.bf16.mxu0 %v854
    %1151 = vmatpush1.bf16.msra.mxu0 %v853
    %1152 = vmatprep.subr.bf16.mxu0 %v850
    %1153 = vmatpush1.bf16.msra.mxu0 %v849
    %1154 = vmatprep.subr.bf16.mxu0 %v846
    %1155 = vmatpush1.bf16.msra.mxu0 %v845
    %1156 = vmatprep.subr.bf16.mxu0 %v842
    %1157 = vmatpush1.bf16.msra.mxu0 %v841
    %1158 = vmatprep.subr.bf16.mxu0 %v838
    %1159 = vmatpush1.bf16.msra.mxu0 %v837
    %1160 = vmatprep.subr.bf16.mxu0 %v834
    %1161 = vmatpush1.bf16.msra.mxu0 %v833
    %1162 = vmatprep.subr.bf16.mxu0 %v894
    %1163 = vmatpush2.bf16.msra.mxu0 %v893
    %1164 = vmatprep.subr.bf16.mxu0 %v890
    %1165 = vmatpush2.bf16.msra.mxu0 %v889
    %1166 = vmatprep.subr.bf16.mxu0 %v886
    %1167 = vmatpush2.bf16.msra.mxu0 %v885
    %1168 = vmatprep.subr.bf16.mxu0 %v882
    %1169 = vmatpush2.bf16.msra.mxu0 %v881
    %1170 = vmatprep.subr.bf16.mxu0 %v878
    %1171 = vmatpush2.bf16.msra.mxu0 %v877
    %1172 = vmatprep.subr.bf16.mxu0 %v874
    %1173 = vmatpush2.bf16.msra.mxu0 %v873
    %1174 = vmatprep.subr.bf16.mxu0 %v870
    %1175 = vmatpush2.bf16.msra.mxu0 %v869
    %1176 = vmatprep.subr.bf16.mxu0 %v866
    %1177 = vmatpush2.bf16.msra.mxu0 %v865
    %1178 = vmatprep.mubr.bf16.mxu0 %v232
    %1179 = vmatmul.mubr.bf16.gmra.mxu0 %v231
    %v1180 = vpop.f32.mrf.mxu0
    %v1181 = vadd.f32 %v1140, %v1180
    %v1182 = vpop.f32.mrf.mxu0
    %v1183 = vadd.f32 %v1142, %v1182
    %v1184 = vpop.f32.mrf.mxu0
    %v1185 = vpop.f32.mrf.mxu0
    %1186 = vdwg.mxu0
    %v1187 = vmax.f32 %v1099, 0.0
    %v1188 = vmax.f32 %v1101, 0.0
    %v1189 = vmax.f32 %v1181, 0.0
    %v1190 = vmax.f32 %v1183, 0.0
    %v1191 = vpack.c.bf16 %v1187, %v1187
    %v1192 = vpack.c.bf16 %v1188, %v1188
    %v1193 = vpack.c.bf16 %v1189, %v1189
    %v1194 = vpack.c.bf16 %v1190, %v1190
    %v1195 = vld [vmem:[#allocation10] sm:$0xf]
    %v1196 = vld [vmem:[#allocation10 + $0x4] sm:$0xf]
    %v1197 = vld [vmem:[#allocation10 + $0x8] sm:$0xf]
    %v1198 = vld [vmem:[#allocation10 + $0xc] sm:$0xf]
    %v1199 = vld [vmem:[#allocation10 + $0x10] sm:$0xf]
    %v1200 = vld [vmem:[#allocation10 + $0x14] sm:$0xf]
    %v1201 = vld [vmem:[#allocation10 + $0x18] sm:$0xf]
    %v1202 = vld [vmem:[#allocation10 + $0x1c] sm:$0xf]
    %v1203 = vld [vmem:[#allocation10 + $0x20] sm:$0xf]
    %v1204 = vld [vmem:[#allocation10 + $0x24] sm:$0xf]
    %v1205 = vld [vmem:[#allocation10 + $0x28] sm:$0xf]
    %v1206 = vld [vmem:[#allocation10 + $0x2c] sm:$0xf]
    %v1207 = vld [vmem:[#allocation10 + $0x30] sm:$0xf]
    %v1208 = vld [vmem:[#allocation10 + $0x34] sm:$0xf]
    %v1209 = vld [vmem:[#allocation10 + $0x38] sm:$0xf]
    %v1210 = vld [vmem:[#allocation10 + $0x3c] sm:$0xf]
    %v1211 = vld [vmem:[#allocation10 + $0x40] sm:$0xf]
    %v1212 = vld [vmem:[#allocation10 + $0x44] sm:$0xf]
    %v1213 = vld [vmem:[#allocation10 + $0x48] sm:$0xf]
    %v1214 = vld [vmem:[#allocation10 + $0x4c] sm:$0xf]
    %v1215 = vld [vmem:[#allocation10 + $0x50] sm:$0xf]
    %v1216 = vld [vmem:[#allocation10 + $0x54] sm:$0xf]
    %v1217 = vld [vmem:[#allocation10 + $0x58] sm:$0xf]
    %v1218 = vld [vmem:[#allocation10 + $0x5c] sm:$0xf]
    %v1219 = vld [vmem:[#allocation10 + $0x60] sm:$0xf]
    %v1220 = vld [vmem:[#allocation10 + $0x64] sm:$0xf]
    %v1221 = vld [vmem:[#allocation10 + $0x68] sm:$0xf]
    %v1222 = vld [vmem:[#allocation10 + $0x6c] sm:$0xf]
    %v1223 = vld [vmem:[#allocation10 + $0x70] sm:$0xf]
    %v1224 = vld [vmem:[#allocation10 + $0x74] sm:$0xf]
    %v1225 = vld [vmem:[#allocation10 + $0x78] sm:$0xf]
    %v1226 = vld [vmem:[#allocation10 + $0x7c] sm:$0xf]
    %v1227 = vld [vmem:[#allocation10 + $0x80] sm:$0xf]
    %v1228 = vld [vmem:[#allocation10 + $0x84] sm:$0xf]
    %v1229 = vld [vmem:[#allocation10 + $0x88] sm:$0xf]
    %v1230 = vld [vmem:[#allocation10 + $0x8c] sm:$0xf]
    %v1231 = vld [vmem:[#allocation10 + $0x90] sm:$0xf]
    %v1232 = vld [vmem:[#allocation10 + $0x94] sm:$0xf]
    %v1233 = vld [vmem:[#allocation10 + $0x98] sm:$0xf]
    %v1234 = vld [vmem:[#allocation10 + $0x9c] sm:$0xf]
    %v1235 = vld [vmem:[#allocation10 + $0xa0] sm:$0xf]
    %v1236 = vld [vmem:[#allocation10 + $0xa4] sm:$0xf]
    %v1237 = vld [vmem:[#allocation10 + $0xa8] sm:$0xf]
    %v1238 = vld [vmem:[#allocation10 + $0xac] sm:$0xf]
    %v1239 = vld [vmem:[#allocation10 + $0xb0] sm:$0xf]
    %v1240 = vld [vmem:[#allocation10 + $0xb4] sm:$0xf]
    %v1241 = vld [vmem:[#allocation10 + $0xb8] sm:$0xf]
    %v1242 = vld [vmem:[#allocation10 + $0xbc] sm:$0xf]
    %v1243 = vld [vmem:[#allocation10 + $0xc0] sm:$0xf]
    %v1244 = vld [vmem:[#allocation10 + $0xc4] sm:$0xf]
    %v1245 = vld [vmem:[#allocation10 + $0xc8] sm:$0xf]
    %v1246 = vld [vmem:[#allocation10 + $0xcc] sm:$0xf]
    %v1247 = vld [vmem:[#allocation10 + $0xd0] sm:$0xf]
    %v1248 = vld [vmem:[#allocation10 + $0xd4] sm:$0xf]
    %v1249 = vld [vmem:[#allocation10 + $0xd8] sm:$0xf]
    %v1250 = vld [vmem:[#allocation10 + $0xdc] sm:$0xf]
    %v1251 = vld [vmem:[#allocation10 + $0xe0] sm:$0xf]
    %v1252 = vld [vmem:[#allocation10 + $0xe4] sm:$0xf]
    %v1253 = vld [vmem:[#allocation10 + $0xe8] sm:$0xf]
    %v1254 = vld [vmem:[#allocation10 + $0xec] sm:$0xf]
    %v1255 = vld [vmem:[#allocation10 + $0xf0] sm:$0xf]
    %v1256 = vld [vmem:[#allocation10 + $0xf4] sm:$0xf]
    %v1257 = vld [vmem:[#allocation10 + $0xf8] sm:$0xf]
    %v1258 = vld [vmem:[#allocation10 + $0xfc] sm:$0xf]
    %v1259 = vld [vmem:[%s6] sm:$0x1]
    %v1261 = vlaneseq
    %v1262 = vshrl.u32 %v1261, 7
    %v1263 = vsub.s32 0, %v1262
    %v1264 = vrot.slane %v1259, %v1263
    %v1330 = vunpack.c.l.b16 %v1195
    %v1331 = vunpack.c.l.b16 %v1196
    %v1332 = vunpack.c.l.b16 %v1197
    %v1333 = vunpack.c.l.b16 %v1198
    %v1334 = vunpack.c.l.b16 %v1199
    %v1335 = vunpack.c.l.b16 %v1200
    %v1336 = vunpack.c.l.b16 %v1201
    %v1337 = vunpack.c.l.b16 %v1202
    %v1338 = vunpack.c.l.b16 %v1203
    %v1339 = vunpack.c.l.b16 %v1204
    %v1340 = vunpack.c.l.b16 %v1205
    %v1341 = vunpack.c.l.b16 %v1206
    %v1342 = vunpack.c.l.b16 %v1207
    %v1343 = vunpack.c.l.b16 %v1208
    %v1344 = vunpack.c.l.b16 %v1209
    %v1345 = vunpack.c.l.b16 %v1210
    %v1346 = vunpack.c.l.b16 %v1211
    %v1347 = vunpack.c.l.b16 %v1212
    %v1348 = vunpack.c.l.b16 %v1213
    %v1349 = vunpack.c.l.b16 %v1214
    %v1350 = vunpack.c.l.b16 %v1215
    %v1351 = vunpack.c.l.b16 %v1216
    %v1352 = vunpack.c.l.b16 %v1217
    %v1353 = vunpack.c.l.b16 %v1218
    %v1354 = vunpack.c.l.b16 %v1219
    %v1355 = vunpack.c.l.b16 %v1220
    %v1356 = vunpack.c.l.b16 %v1221
    %v1357 = vunpack.c.l.b16 %v1222
    %v1358 = vunpack.c.l.b16 %v1223
    %v1359 = vunpack.c.l.b16 %v1224
    %v1360 = vunpack.c.l.b16 %v1225
    %v1361 = vunpack.c.l.b16 %v1226
    %v1362 = vunpack.c.l.b16 %v1227
    %v1363 = vunpack.c.l.b16 %v1228
    %v1364 = vunpack.c.l.b16 %v1229
    %v1365 = vunpack.c.l.b16 %v1230
    %v1366 = vunpack.c.l.b16 %v1231
    %v1367 = vunpack.c.l.b16 %v1232
    %v1368 = vunpack.c.l.b16 %v1233
    %v1369 = vunpack.c.l.b16 %v1234
    %v1370 = vunpack.c.l.b16 %v1235
    %v1371 = vunpack.c.l.b16 %v1236
    %v1372 = vunpack.c.l.b16 %v1237
    %v1373 = vunpack.c.l.b16 %v1238
    %v1374 = vunpack.c.l.b16 %v1239
    %v1375 = vunpack.c.l.b16 %v1240
    %v1376 = vunpack.c.l.b16 %v1241
    %v1377 = vunpack.c.l.b16 %v1242
    %v1378 = vunpack.c.l.b16 %v1243
    %v1379 = vunpack.c.l.b16 %v1244
    %v1380 = vunpack.c.l.b16 %v1245
    %v1381 = vunpack.c.l.b16 %v1246
    %v1382 = vunpack.c.l.b16 %v1247
    %v1383 = vunpack.c.l.b16 %v1248
    %v1384 = vunpack.c.l.b16 %v1249
    %v1385 = vunpack.c.l.b16 %v1250
    %v1386 = vunpack.c.l.b16 %v1251
    %v1387 = vunpack.c.l.b16 %v1252
    %v1388 = vunpack.c.l.b16 %v1253
    %v1389 = vunpack.c.l.b16 %v1254
    %v1390 = vunpack.c.l.b16 %v1255
    %v1391 = vunpack.c.l.b16 %v1256
    %v1392 = vunpack.c.l.b16 %v1257
    %v1393 = vunpack.c.l.b16 %v1258
    %v1394 = vpack.c.b16 %v1331, %v1330
    %v1395 = vpack.c.b16 %v1333, %v1332
    %v1396 = vpack.c.b16 %v1335, %v1334
    %v1397 = vpack.c.b16 %v1337, %v1336
    %v1398 = vpack.c.b16 %v1339, %v1338
    %v1399 = vpack.c.b16 %v1341, %v1340
    %v1400 = vpack.c.b16 %v1343, %v1342
    %v1401 = vpack.c.b16 %v1345, %v1344
    %v1402 = vpack.c.b16 %v1347, %v1346
    %v1403 = vpack.c.b16 %v1349, %v1348
    %v1404 = vpack.c.b16 %v1351, %v1350
    %v1405 = vpack.c.b16 %v1353, %v1352
    %v1406 = vpack.c.b16 %v1355, %v1354
    %v1407 = vpack.c.b16 %v1357, %v1356
    %v1408 = vpack.c.b16 %v1359, %v1358
    %v1409 = vpack.c.b16 %v1361, %v1360
    %v1410 = vpack.c.b16 %v1363, %v1362
    %v1411 = vpack.c.b16 %v1365, %v1364
    %v1412 = vpack.c.b16 %v1367, %v1366
    %v1413 = vpack.c.b16 %v1369, %v1368
    %v1414 = vpack.c.b16 %v1371, %v1370
    %v1415 = vpack.c.b16 %v1373, %v1372
    %v1416 = vpack.c.b16 %v1375, %v1374
    %v1417 = vpack.c.b16 %v1377, %v1376
    %v1418 = vpack.c.b16 %v1379, %v1378
    %v1419 = vpack.c.b16 %v1381, %v1380
    %v1420 = vpack.c.b16 %v1383, %v1382
    %v1421 = vpack.c.b16 %v1385, %v1384
    %v1422 = vpack.c.b16 %v1387, %v1386
    %v1423 = vpack.c.b16 %v1389, %v1388
    %v1424 = vpack.c.b16 %v1391, %v1390
    %v1425 = vpack.c.b16 %v1393, %v1392
    %1458 = vmatprep.subr.bf16.mxu0 0
    %1459 = vmatpush1.bf16.msra.mxu0 %v1401
    %1460 = vmatprep.subr.bf16.mxu0 0
    %1461 = vmatpush1.bf16.msra.mxu0 %v1400
    %1462 = vmatprep.subr.bf16.mxu0 0
    %1463 = vmatpush1.bf16.msra.mxu0 %v1399
    %1464 = vmatprep.subr.bf16.mxu0 0
    %1465 = vmatpush1.bf16.msra.mxu0 %v1398
    %1466 = vmatprep.subr.bf16.mxu0 0
    %1467 = vmatpush1.bf16.msra.mxu0 %v1397
    %1468 = vmatprep.subr.bf16.mxu0 0
    %1469 = vmatpush1.bf16.msra.mxu0 %v1396
    %1470 = vmatprep.subr.bf16.mxu0 0
    %1471 = vmatpush1.bf16.msra.mxu0 %v1395
    %1472 = vmatprep.subr.bf16.mxu0 0
    %1473 = vmatpush1.bf16.msra.mxu0 %v1394
    %1474 = vmatprep.subr.bf16.mxu0 0
    %1475 = vmatpush2.bf16.msra.mxu0 %v1409
    %1476 = vmatprep.subr.bf16.mxu0 0
    %1477 = vmatpush2.bf16.msra.mxu0 %v1408
    %1478 = vmatprep.subr.bf16.mxu0 0
    %1479 = vmatpush2.bf16.msra.mxu0 %v1407
    %1480 = vmatprep.subr.bf16.mxu0 0
    %1481 = vmatpush2.bf16.msra.mxu0 %v1406
    %1482 = vmatprep.subr.bf16.mxu0 0
    %1483 = vmatpush2.bf16.msra.mxu0 %v1405
    %1484 = vmatprep.subr.bf16.mxu0 0
    %1485 = vmatpush2.bf16.msra.mxu0 %v1404
    %1486 = vmatprep.subr.bf16.mxu0 0
    %1487 = vmatpush2.bf16.msra.mxu0 %v1403
    %1488 = vmatprep.subr.bf16.mxu0 0
    %1489 = vmatpush2.bf16.msra.mxu0 %v1402
    %1490 = vmatprep.mubr.bf16.mxu0 %v1192
    %1491 = vmatmul.mubr.bf16.gmra.mxu0 %v1191
    %v1492 = vpop.f32.mrf.mxu0
    %v1493 = vadd.f32 %v1264, %v1492
    %v1494 = vpop.f32.mrf.mxu0
    %v1495 = vpop.f32.mrf.mxu0
    %v1496 = vpop.f32.mrf.mxu0
    %1497 = vdwg.mxu0
    %1498 = vmatprep.subr.bf16.mxu0 0
    %1499 = vmatpush1.bf16.msra.mxu0 %v1417
    %1500 = vmatprep.subr.bf16.mxu0 0
    %1501 = vmatpush1.bf16.msra.mxu0 %v1416
    %1502 = vmatprep.subr.bf16.mxu0 0
    %1503 = vmatpush1.bf16.msra.mxu0 %v1415
    %1504 = vmatprep.subr.bf16.mxu0 0
    %1505 = vmatpush1.bf16.msra.mxu0 %v1414
    %1506 = vmatprep.subr.bf16.mxu0 0
    %1507 = vmatpush1.bf16.msra.mxu0 %v1413
    %1508 = vmatprep.subr.bf16.mxu0 0
    %1509 = vmatpush1.bf16.msra.mxu0 %v1412
    %1510 = vmatprep.subr.bf16.mxu0 0
    %1511 = vmatpush1.bf16.msra.mxu0 %v1411
    %1512 = vmatprep.subr.bf16.mxu0 0
    %1513 = vmatpush1.bf16.msra.mxu0 %v1410
    %1514 = vmatprep.subr.bf16.mxu0 0
    %1515 = vmatpush2.bf16.msra.mxu0 %v1425
    %1516 = vmatprep.subr.bf16.mxu0 0
    %1517 = vmatpush2.bf16.msra.mxu0 %v1424
    %1518 = vmatprep.subr.bf16.mxu0 0
    %1519 = vmatpush2.bf16.msra.mxu0 %v1423
    %1520 = vmatprep.subr.bf16.mxu0 0
    %1521 = vmatpush2.bf16.msra.mxu0 %v1422
    %1522 = vmatprep.subr.bf16.mxu0 0
    %1523 = vmatpush2.bf16.msra.mxu0 %v1421
    %1524 = vmatprep.subr.bf16.mxu0 0
    %1525 = vmatpush2.bf16.msra.mxu0 %v1420
    %1526 = vmatprep.subr.bf16.mxu0 0
    %1527 = vmatpush2.bf16.msra.mxu0 %v1419
    %1528 = vmatprep.subr.bf16.mxu0 0
    %1529 = vmatpush2.bf16.msra.mxu0 %v1418
    %1530 = vmatprep.mubr.bf16.mxu0 %v1194
    %1531 = vmatmul.mubr.bf16.gmra.mxu0 %v1193
    %v1532 = vpop.f32.mrf.mxu0
    %v1533 = vadd.f32 %v1493, %v1532
    %v1534 = vpop.f32.mrf.mxu0
    %v1535 = vpop.f32.mrf.mxu0
    %v1536 = vpop.f32.mrf.mxu0
    %1537 = vdwg.mxu0
    %v1538 = vmul.f32 %v1533, 0.5
    %v1539 = vtanh.pop %v1538
    %v1540 = vmul.f32 %v1539, 0.5
    %v1541 = vadd.f32 %v1540, 0.5
    %v1542 = vmax.f32 %v1541, 0.0
    %v1543 = vmin.f32 %v1542, 1.0
    %v1544 = vpack.c.bf16 %v1543, %v1543
    %1545 = vst [vmem:[#allocation11] sm:$0xf] %v1544
    // Predicated region
    $region50: #{tpu_custom_call.1} parent=1 // pred_check
      _
    $region51: #{tpu_custom_call.1} parent=1 // pred_check_branch
      %1547 = sbr.rel (0) target = $region53
    $region52: #{tpu_custom_call.1} parent=1 // pred_region
      %s1549 = ssub.s32 64, 64
      %1550 = vsyncadd [#allocation4], %s1549
      %s1552 = sshll.u32 [#allocation11], 4
      %s1553 = int_to_ptr.vmem [resolvable:$true] %s1552
      %1555 = dma.vmem_to_hbm [thread:$0]  %s1553, 64, %s7, [#allocation4]
    $region53: #{tpu_custom_call.1} parent=1 // pred_fallthru
      _
    // Predicated region
    $region54: #{tpu_custom_call.1} parent=1 // pred_check
      _
    $region55: #{tpu_custom_call.1} parent=1 // pred_check_branch
      %1557 = sbr.rel (0) target = $region57
    $region56: #{tpu_custom_call.1} parent=1 // pred_region
      %1558 = dma.done [#allocation4], 64
    $region57: #{tpu_custom_call.1} parent=1 // pred_fallthru
      _
    %1559 = vsyncpa [#allocation3], 1
    %1560 = vsyncpa [#allocation6], 1
    %1561 = vsyncpa [#allocation9], 1
    %1562 = vsyncpa [#allocation4], 1

// kernel: tpu_custom_call.1
$region0: #{tpu_custom_call.1}
  #allocation0 [shape = 'u32[]', space=smem, size = 0x4, offset = 0x4, fixed_abs, tag = 'smem constant byte address 0x4 - core index']
  #allocation1 [shape = 'u32[144,128]{1,0:T(1,128)}', space=vmem, size = 0x12000, scoped, tag = 'internal scratch']
  %s0 = inlined_call_operand.hbm [shape: f32[8,8], index: 0, kind: input, shape index: {}]
  %s1 = inlined_call_operand.hbm [shape: bf16[8,512], index: 1, kind: input, shape index: {}]
  %s2 = inlined_call_operand.hbm [shape: f32[1,512], index: 2, kind: input, shape index: {}]
  %s3 = inlined_call_operand.hbm [shape: bf16[512,512], index: 3, kind: input, shape index: {}]
  %s4 = inlined_call_operand.vmem [shape: f32[1,512], index: 4, kind: input, shape index: {}]
  %s5 = inlined_call_operand.hbm [shape: bf16[512,128], index: 5, kind: input, shape index: {}]
  %s6 = inlined_call_operand.vmem [shape: f32[1,128], index: 6, kind: input, shape index: {}]
  %s7 = inlined_call_operand.hbm [shape: bf16[8,128], index: 7, kind: output, shape index: {}]
  %s8 = sld [smem:[#allocation0]]
  $region58: #{tpu_custom_call.1} parent=0
    _
  %s10 = ssub.s32 1, %s8
  %s11 = scalar_select 0, %s10, %s8
  $region1: #{tpu_custom_call.1} parent=0
    #allocation2 [shape = 'u8[4096]{0}', space=vmem, size = 0x1000, scoped, tag = 'input window, operand 0, single buffered']
    #allocation3 [shape = 's32[1]{0}', space=sflag, size = 0x4, scoped, tag = 'scoped memory for tpu_custom_call.1']
    #allocation4 [shape = 's32[1]{0}', space=sflag, size = 0x4, scoped, tag = 'scoped memory for tpu_custom_call.1']
    #allocation5 [shape = 'u8[8192]{0}', space=vmem, size = 0x2000, scoped, tag = 'input window, operand 1, single buffered']
    #allocation6 [shape = 's32[1]{0}', space=sflag, size = 0x4, scoped, tag = 'scoped memory for tpu_custom_call.1']
    #allocation7 [shape = 'u8[2048]{0}', space=vmem, size = 0x800, scoped, tag = 'input window, operand 2, single buffered']
    #allocation8 [shape = 'u8[524288]{0}', space=vmem, size = 0x80000, scoped, tag = 'input window, operand 3, single buffered']
    #allocation9 [shape = 's32[1]{0}', space=sflag, size = 0x4, scoped, tag = 'scoped memory for tpu_custom_call.1']
    #allocation10 [shape = 'u8[131072]{0}', space=vmem, size = 0x20000, scoped, tag = 'input window, operand 5, single buffered']
    #allocation11 [shape = 'u8[2048]{0}', space=vmem, size = 0x800, scoped, tag = 'output window, operand 0, single buffered']
    %12 = vsyncpa [#allocation3], 0
    %13 = vsyncpa [#allocation6], 0
    %14 = vsyncpa [#allocation9], 0
    %15 = vsyncpa [#allocation4], 0
    // Predicated region
    $region2: #{tpu_custom_call.1} parent=1 // pred_check
      _
    $region3: #{tpu_custom_call.1} parent=1 // pred_check_branch
      %17 = sbr.rel (0) target = $region5
    $region4: #{tpu_custom_call.1} parent=1 // pred_region
      %s19 = ssub.s32 128, 128
      %20 = vsyncadd [#allocation3], %s19
      %s22 = sshll.u32 [#allocation2], 4
      %s23 = int_to_ptr.vmem [resolvable:$true] %s22
      %25 = dma.hbm_to_vmem [thread:$0]  %s0, 128, %s23, [#allocation3]
    $region5: #{tpu_custom_call.1} parent=1 // pred_fallthru
      _
    // Predicated region
    $region6: #{tpu_custom_call.1} parent=1 // pred_check
      _
    $region7: #{tpu_custom_call.1} parent=1 // pred_check_branch
      %27 = sbr.rel (0) target = $region9
    $region8: #{tpu_custom_call.1} parent=1 // pred_region
      %s29 = ssub.s32 256, 256
      %30 = vsyncadd [#allocation6], %s29
      %s32 = sshll.u32 [#allocation5], 4
      %s33 = int_to_ptr.vmem [resolvable:$true] %s32
      %35 = dma.hbm_to_vmem [thread:$0]  %s1, 256, %s33, [#allocation6]
    $region9: #{tpu_custom_call.1} parent=1 // pred_fallthru
      _
    // Predicated region
    $region10: #{tpu_custom_call.1} parent=1 // pred_check
      _
    $region11: #{tpu_custom_call.1} parent=1 // pred_check_branch
      %37 = sbr.rel (0) target = $region13
    $region12: #{tpu_custom_call.1} parent=1 // pred_region
      %s39 = ssub.s32 64, 64
      %40 = vsyncadd [#allocation6], %s39
      %s42 = sshll.u32 [#allocation7], 4
      %s43 = int_to_ptr.vmem [resolvable:$true] %s42
      %45 = dma.hbm_to_vmem [thread:$0]  %s2, 64, %s43, [#allocation6]
    $region13: #{tpu_custom_call.1} parent=1 // pred_fallthru
      _
    // Predicated region
    $region14: #{tpu_custom_call.1} parent=1 // pred_check
      _
    $region15: #{tpu_custom_call.1} parent=1 // pred_check_branch
      %47 = sbr.rel (0) target = $region17
    $region16: #{tpu_custom_call.1} parent=1 // pred_region
      %s49 = ssub.s32 16384, 16384
      %50 = vsyncadd [#allocation9], %s49
      %s51 = sshll.u32 [#allocation8], 4
      %s52 = int_to_ptr.vmem [resolvable:$true] %s51
      %57 = dma.hbm_to_vmem [thread:$0]  %s3, 16384, %s52, [#allocation9], 256, 256, 16
    $region17: #{tpu_custom_call.1} parent=1 // pred_fallthru
      _
    // Predicated region
    $region18: #{tpu_custom_call.1} parent=1 // pred_check
      _
    $region19: #{tpu_custom_call.1} parent=1 // pred_check_branch
      %59 = sbr.rel (0) target = $region21
    $region20: #{tpu_custom_call.1} parent=1 // pred_region
      _
    $region21: #{tpu_custom_call.1} parent=1 // pred_fallthru
      _
    // Predicated region
    $region22: #{tpu_custom_call.1} parent=1 // pred_check
      _
    $region23: #{tpu_custom_call.1} parent=1 // pred_check_branch
      %61 = sbr.rel (0) target = $region25
    $region24: #{tpu_custom_call.1} parent=1 // pred_region
      %s63 = ssub.s32 4096, 4096
      %64 = vsyncadd [#allocation9], %s63
      %s65 = sshll.u32 [#allocation10], 4
      %s66 = int_to_ptr.vmem [resolvable:$true] %s65
      %71 = dma.hbm_to_vmem [thread:$0]  %s5, 4096, %s66, [#allocation9], 64, 64, 4
    $region25: #{tpu_custom_call.1} parent=1 // pred_fallthru
      _
    // Predicated region
    $region26: #{tpu_custom_call.1} parent=1 // pred_check
      _
    $region27: #{tpu_custom_call.1} parent=1 // pred_check_branch
      %73 = sbr.rel (0) target = $region29
    $region28: #{tpu_custom_call.1} parent=1 // pred_region
      _
    $region29: #{tpu_custom_call.1} parent=1 // pred_fallthru
      _
    // Predicated region
    $region30: #{tpu_custom_call.1} parent=1 // pred_check
      _
    $region31: #{tpu_custom_call.1} parent=1 // pred_check_branch
      %75 = sbr.rel (0) target = $region33
    $region32: #{tpu_custom_call.1} parent=1 // pred_region
      %76 = dma.done [#allocation3], 128
    $region33: #{tpu_custom_call.1} parent=1 // pred_fallthru
      _
    // Predicated region
    $region34: #{tpu_custom_call.1} parent=1 // pred_check
      _
    $region35: #{tpu_custom_call.1} parent=1 // pred_check_branch
      %78 = sbr.rel (0) target = $region37
    $region36: #{tpu_custom_call.1} parent=1 // pred_region
      %79 = dma.done [#allocation6], 256
    $region37: #{tpu_custom_call.1} parent=1 // pred_fallthru
      _
    // Predicated region
    $region38: #{tpu_custom_call.1} parent=1 // pred_check
      _
    $region39: #{tpu_custom_call.1} parent=1 // pred_check_branch
      %81 = sbr.rel (0) target = $region41
    $region40: #{tpu_custom_call.1} parent=1 // pred_region
      %82 = dma.done [#allocation6], 64
    $region41: #{tpu_custom_call.1} parent=1 // pred_fallthru
      _
    // Predicated region
    $region42: #{tpu_custom_call.1} parent=1 // pred_check
      _
    $region43: #{tpu_custom_call.1} parent=1 // pred_check_branch
      %84 = sbr.rel (0) target = $region45
    $region44: #{tpu_custom_call.1} parent=1 // pred_region
      %85 = dma.done [#allocation9], 16384
    $region45: #{tpu_custom_call.1} parent=1 // pred_fallthru
      _
    // Predicated region
    $region46: #{tpu_custom_call.1} parent=1 // pred_check
      _
    $region47: #{tpu_custom_call.1} parent=1 // pred_check_branch
      %87 = sbr.rel (0) target = $region49
    $region48: #{tpu_custom_call.1} parent=1 // pred_region
      %88 = dma.done [#allocation9], 4096
    $region49: #{tpu_custom_call.1} parent=1 // pred_fallthru
      _
    %v90 = vld [vmem:[#allocation2] sm:$0xff]
    %v91 = vpack.c.bf16 %v90, %v90
    %v92 = vld [vmem:[#allocation5] sm:$0xff]
    %v93 = vld [vmem:[#allocation5 + $0x8] sm:$0xff]
    %v94 = vld [vmem:[#allocation7] sm:$0xf]
    %v96 = vlaneseq
    %v97 = vshrl.u32 %v96, 7
    %v98 = vsub.s32 0, %v97
    %v99 = vrot.slane %v94, %v98
    %v100 = vlaneseq
    %v101 = vshrl.u32 %v100, 7
    %v102 = vsub.s32 1, %v101
    %v103 = vrot.slane %v94, %v102
    %v104 = vlaneseq
    %v105 = vshrl.u32 %v104, 7
    %v106 = vsub.s32 2, %v105
    %v107 = vrot.slane %v94, %v106
    %v108 = vlaneseq
    %v109 = vshrl.u32 %v108, 7
    %v110 = vsub.s32 3, %v109
    %v111 = vrot.slane %v94, %v110
    %v118 = vunpack.c.l.b16 %v92
    %v119 = vunpack.c.h.b16 %v92
    %v120 = vunpack.c.l.b16 %v93
    %v121 = vunpack.c.h.b16 %v93
    %v122 = vpack.c.b16 %v118, %v118
    %v123 = vpack.c.b16 %v119, %v119
    %v124 = vpack.c.b16 %v120, %v120
    %v125 = vpack.c.b16 %v121, %v121
    %vm126 = vcmask 64512
    %v128 = vsel %vm126, %v91, 0
    %vm130 = vcmask 1043456
    %v132 = vsel %vm130, %v122, 0
    %v135 = vsel %vm130, %v123, 0
    %v138 = vsel %vm130, %v124, 0
    %v141 = vsel %vm130, %v125, 0
    %143 = vmatprep.subr.bf16.mxu0 0
    %144 = vmatpush1.bf16.msra.mxu0 0
    %145 = vmatprep.subr.bf16.mxu0 0
    %146 = vmatpush1.bf16.msra.mxu0 0
    %147 = vmatprep.subr.bf16.mxu0 0
    %148 = vmatpush1.bf16.msra.mxu0 0
    %149 = vmatprep.subr.bf16.mxu0 0
    %150 = vmatpush1.bf16.msra.mxu0 0
    %151 = vmatprep.subr.bf16.mxu0 0
    %152 = vmatpush1.bf16.msra.mxu0 0
    %153 = vmatprep.subr.bf16.mxu0 0
    %154 = vmatpush1.bf16.msra.mxu0 0
    %155 = vmatprep.subr.bf16.mxu0 0
    %156 = vmatpush1.bf16.msra.mxu0 0
    %157 = vmatprep.subr.bf16.mxu0 %v135
    %158 = vmatpush1.bf16.msra.mxu0 %v132
    %159 = vmatprep.subr.bf16.mxu0 0
    %160 = vmatpush2.bf16.msra.mxu0 0
    %161 = vmatprep.subr.bf16.mxu0 0
    %162 = vmatpush2.bf16.msra.mxu0 0
    %163 = vmatprep.subr.bf16.mxu0 0
    %164 = vmatpush2.bf16.msra.mxu0 0
    %165 = vmatprep.subr.bf16.mxu0 0
    %166 = vmatpush2.bf16.msra.mxu0 0
    %167 = vmatprep.subr.bf16.mxu0 0
    %168 = vmatpush2.bf16.msra.mxu0 0
    %169 = vmatprep.subr.bf16.mxu0 0
    %170 = vmatpush2.bf16.msra.mxu0 0
    %171 = vmatprep.subr.bf16.mxu0 0
    %172 = vmatpush2.bf16.msra.mxu0 0
    %173 = vmatprep.subr.bf16.mxu0 0
    %174 = vmatpush2.bf16.msra.mxu0 0
    %175 = vmatprep.mubr.bf16.mxu0 0
    %176 = vmatmul.mubr.bf16.gmra.mxu0 %v128
    %v177 = vpop.f32.mrf.mxu0
    %v178 = vadd.f32 %v99, %v177
    %v179 = vpop.f32.mrf.mxu0
    %v180 = vadd.f32 %v103, %v179
    %v181 = vpop.f32.mrf.mxu0
    %v182 = vpop.f32.mrf.mxu0
    %183 = vdwg.mxu0
    %184 = vmatprep.subr.bf16.mxu0 0
    %185 = vmatpush1.bf16.msra.mxu0 0
    %186 = vmatprep.subr.bf16.mxu0 0
    %187 = vmatpush1.bf16.msra.mxu0 0
    %188 = vmatprep.subr.bf16.mxu0 0
    %189 = vmatpush1.bf16.msra.mxu0 0
    %190 = vmatprep.subr.bf16.mxu0 0
    %191 = vmatpush1.bf16.msra.mxu0 0
    %192 = vmatprep.subr.bf16.mxu0 0
    %193 = vmatpush1.bf16.msra.mxu0 0
    %194 = vmatprep.subr.bf16.mxu0 0
    %195 = vmatpush1.bf16.msra.mxu0 0
    %196 = vmatprep.subr.bf16.mxu0 0
    %197 = vmatpush1.bf16.msra.mxu0 0
    %198 = vmatprep.subr.bf16.mxu0 %v141
    %199 = vmatpush1.bf16.msra.mxu0 %v138
    %200 = vmatprep.subr.bf16.mxu0 0
    %201 = vmatpush2.bf16.msra.mxu0 0
    %202 = vmatprep.subr.bf16.mxu0 0
    %203 = vmatpush2.bf16.msra.mxu0 0
    %204 = vmatprep.subr.bf16.mxu0 0
    %205 = vmatpush2.bf16.msra.mxu0 0
    %206 = vmatprep.subr.bf16.mxu0 0
    %207 = vmatpush2.bf16.msra.mxu0 0
    %208 = vmatprep.subr.bf16.mxu0 0
    %209 = vmatpush2.bf16.msra.mxu0 0
    %210 = vmatprep.subr.bf16.mxu0 0
    %211 = vmatpush2.bf16.msra.mxu0 0
    %212 = vmatprep.subr.bf16.mxu0 0
    %213 = vmatpush2.bf16.msra.mxu0 0
    %214 = vmatprep.subr.bf16.mxu0 0
    %215 = vmatpush2.bf16.msra.mxu0 0
    %216 = vmatprep.mubr.bf16.mxu0 0
    %217 = vmatmul.mubr.bf16.gmra.mxu0 %v128
    %v218 = vpop.f32.mrf.mxu0
    %v219 = vadd.f32 %v107, %v218
    %v220 = vpop.f32.mrf.mxu0
    %v221 = vadd.f32 %v111, %v220
    %v222 = vpop.f32.mrf.mxu0
    %v223 = vpop.f32.mrf.mxu0
    %224 = vdwg.mxu0
    %v225 = vmax.f32 %v178, 0.0
    %v226 = vmax.f32 %v180, 0.0
    %v227 = vmax.f32 %v219, 0.0
    %v228 = vmax.f32 %v221, 0.0
    %v229 = vpack.c.bf16 %v225, %v225
    %v230 = vpack.c.bf16 %v226, %v226
    %v231 = vpack.c.bf16 %v227, %v227
    %v232 = vpack.c.bf16 %v228, %v228
    %v233 = vld [vmem:[#allocation8] sm:$0xff]
    %v234 = vld [vmem:[#allocation8 + $0x8] sm:$0xff]
    %v235 = vld [vmem:[#allocation8 + $0x10] sm:$0xff]
    %v236 = vld [vmem:[#allocation8 + $0x18] sm:$0xff]
    %v237 = vld [vmem:[#allocation8 + $0x20] sm:$0xff]
    %v238 = vld [vmem:[#allocation8 + $0x28] sm:$0xff]
    %v239 = vld [vmem:[#allocation8 + $0x30] sm:$0xff]
    %v240 = vld [vmem:[#allocation8 + $0x38] sm:$0xff]
    %v241 = vld [vmem:[#allocation8 + $0x40] sm:$0xff]
    %v242 = vld [vmem:[#allocation8 + $0x48] sm:$0xff]
    %v243 = vld [vmem:[#allocation8 + $0x50] sm:$0xff]
    %v244 = vld [vmem:[#allocation8 + $0x58] sm:$0xff]
    %v245 = vld [vmem:[#allocation8 + $0x60] sm:$0xff]
    %v246 = vld [vmem:[#allocation8 + $0x68] sm:$0xff]
    %v247 = vld [vmem:[#allocation8 + $0x70] sm:$0xff]
    %v248 = vld [vmem:[#allocation8 + $0x78] sm:$0xff]
    %v249 = vld [vmem:[#allocation8 + $0x80] sm:$0xff]
    %v250 = vld [vmem:[#allocation8 + $0x88] sm:$0xff]
    %v251 = vld [vmem:[#allocation8 + $0x90] sm:$0xff]
    %v252 = vld [vmem:[#allocation8 + $0x98] sm:$0xff]
    %v253 = vld [vmem:[#allocation8 + $0xa0] sm:$0xff]
    %v254 = vld [vmem:[#allocation8 + $0xa8] sm:$0xff]
    %v255 = vld [vmem:[#allocation8 + $0xb0] sm:$0xff]
    %v256 = vld [vmem:[#allocation8 + $0xb8] sm:$0xff]
    %v257 = vld [vmem:[#allocation8 + $0xc0] sm:$0xff]
    %v258 = vld [vmem:[#allocation8 + $0xc8] sm:$0xff]
    %v259 = vld [vmem:[#allocation8 + $0xd0] sm:$0xff]
    %v260 = vld [vmem:[#allocation8 + $0xd8] sm:$0xff]
    %v261 = vld [vmem:[#allocation8 + $0xe0] sm:$0xff]
    %v262 = vld [vmem:[#allocation8 + $0xe8] sm:$0xff]
    %v263 = vld [vmem:[#allocation8 + $0xf0] sm:$0xff]
    %v264 = vld [vmem:[#allocation8 + $0xf8] sm:$0xff]
    %v265 = vld [vmem:[#allocation8 + $0x100] sm:$0xff]
    %v266 = vld [vmem:[#allocation8 + $0x108] sm:$0xff]
    %v267 = vld [vmem:[#allocation8 + $0x110] sm:$0xff]
    %v268 = vld [vmem:[#allocation8 + $0x118] sm:$0xff]
    %v269 = vld [vmem:[#allocation8 + $0x120] sm:$0xff]
    %v270 = vld [vmem:[#allocation8 + $0x128] sm:$0xff]
    %v271 = vld [vmem:[#allocation8 + $0x130] sm:$0xff]
    %v272 = vld [vmem:[#allocation8 + $0x138] sm:$0xff]
    %v273 = vld [vmem:[#allocation8 + $0x140] sm:$0xff]
    %v274 = vld [vmem:[#allocation8 + $0x148] sm:$0xff]
    %v275 = vld [vmem:[#allocation8 + $0x150] sm:$0xff]
    %v276 = vld [vmem:[#allocation8 + $0x158] sm:$0xff]
    %v277 = vld [vmem:[#allocation8 + $0x160] sm:$0xff]
    %v278 = vld [vmem:[#allocation8 + $0x168] sm:$0xff]
    %v279 = vld [vmem:[#allocation8 + $0x170] sm:$0xff]
    %v280 = vld [vmem:[#allocation8 + $0x178] sm:$0xff]
    %v281 = vld [vmem:[#allocation8 + $0x180] sm:$0xff]
    %v282 = vld [vmem:[#allocation8 + $0x188] sm:$0xff]
    %v283 = vld [vmem:[#allocation8 + $0x190] sm:$0xff]
    %v284 = vld [vmem:[#allocation8 + $0x198] sm:$0xff]
    %v285 = vld [vmem:[#allocation8 + $0x1a0] sm:$0xff]
    %v286 = vld [vmem:[#allocation8 + $0x1a8] sm:$0xff]
    %v287 = vld [vmem:[#allocation8 + $0x1b0] sm:$0xff]
    %v288 = vld [vmem:[#allocation8 + $0x1b8] sm:$0xff]
    %v289 = vld [vmem:[#allocation8 + $0x1c0] sm:$0xff]
    %v290 = vld [vmem:[#allocation8 + $0x1c8] sm:$0xff]
    %v291 = vld [vmem:[#allocation8 + $0x1d0] sm:$0xff]
    %v292 = vld [vmem:[#allocation8 + $0x1d8] sm:$0xff]
    %v293 = vld [vmem:[#allocation8 + $0x1e0] sm:$0xff]
    %v294 = vld [vmem:[#allocation8 + $0x1e8] sm:$0xff]
    %v295 = vld [vmem:[#allocation8 + $0x1f0] sm:$0xff]
    %v296 = vld [vmem:[#allocation8 + $0x1f8] sm:$0xff]
    %v297 = vld [vmem:[#allocation8 + $0x200] sm:$0xff]
    %v298 = vld [vmem:[#allocation8 + $0x208] sm:$0xff]
    %v299 = vld [vmem:[#allocation8 + $0x210] sm:$0xff]
    %v300 = vld [vmem:[#allocation8 + $0x218] sm:$0xff]
    %v301 = vld [vmem:[#allocation8 + $0x220] sm:$0xff]
    %v302 = vld [vmem:[#allocation8 + $0x228] sm:$0xff]
    %v303 = vld [vmem:[#allocation8 + $0x230] sm:$0xff]
    %v304 = vld [vmem:[#allocation8 + $0x238] sm:$0xff]
    %v305 = vld [vmem:[#allocation8 + $0x240] sm:$0xff]
    %v306 = vld [vmem:[#allocation8 + $0x248] sm:$0xff]
    %v307 = vld [vmem:[#allocation8 + $0x250] sm:$0xff]
    %v308 = vld [vmem:[#allocation8 + $0x258] sm:$0xff]
    %v309 = vld [vmem:[#allocation8 + $0x260] sm:$0xff]
    %v310 = vld [vmem:[#allocation8 + $0x268] sm:$0xff]
    %v311 = vld [vmem:[#allocation8 + $0x270] sm:$0xff]
    %v312 = vld [vmem:[#allocation8 + $0x278] sm:$0xff]
    %v313 = vld [vmem:[#allocation8 + $0x280] sm:$0xff]
    %v314 = vld [vmem:[#allocation8 + $0x288] sm:$0xff]
    %v315 = vld [vmem:[#allocation8 + $0x290] sm:$0xff]
    %v316 = vld [vmem:[#allocation8 + $0x298] sm:$0xff]
    %v317 = vld [vmem:[#allocation8 + $0x2a0] sm:$0xff]
    %v318 = vld [vmem:[#allocation8 + $0x2a8] sm:$0xff]
    %v319 = vld [vmem:[#allocation8 + $0x2b0] sm:$0xff]
    %v320 = vld [vmem:[#allocation8 + $0x2b8] sm:$0xff]
    %v321 = vld [vmem:[#allocation8 + $0x2c0] sm:$0xff]
    %v322 = vld [vmem:[#allocation8 + $0x2c8] sm:$0xff]
    %v323 = vld [vmem:[#allocation8 + $0x2d0] sm:$0xff]
    %v324 = vld [vmem:[#allocation8 + $0x2d8] sm:$0xff]
    %v325 = vld [vmem:[#allocation8 + $0x2e0] sm:$0xff]
    %v326 = vld [vmem:[#allocation8 + $0x2e8] sm:$0xff]
    %v327 = vld [vmem:[#allocation8 + $0x2f0] sm:$0xff]
    %v328 = vld [vmem:[#allocation8 + $0x2f8] sm:$0xff]
    %v329 = vld [vmem:[#allocation8 + $0x300] sm:$0xff]
    %v330 = vld [vmem:[#allocation8 + $0x308] sm:$0xff]
    %v331 = vld [vmem:[#allocation8 + $0x310] sm:$0xff]
    %v332 = vld [vmem:[#allocation8 + $0x318] sm:$0xff]
    %v333 = vld [vmem:[#allocation8 + $0x320] sm:$0xff]
    %v334 = vld [vmem:[#allocation8 + $0x328] sm:$0xff]
    %v335 = vld [vmem:[#allocation8 + $0x330] sm:$0xff]
    %v336 = vld [vmem:[#allocation8 + $0x338] sm:$0xff]
    %v337 = vld [vmem:[#allocation8 + $0x340] sm:$0xff]
    %v338 = vld [vmem:[#allocation8 + $0x348] sm:$0xff]
    %v339 = vld [vmem:[#allocation8 + $0x350] sm:$0xff]
    %v340 = vld [vmem:[#allocation8 + $0x358] sm:$0xff]
    %v341 = vld [vmem:[#allocation8 + $0x360] sm:$0xff]
    %v342 = vld [vmem:[#allocation8 + $0x368] sm:$0xff]
    %v343 = vld [vmem:[#allocation8 + $0x370] sm:$0xff]
    %v344 = vld [vmem:[#allocation8 + $0x378] sm:$0xff]
    %v345 = vld [vmem:[#allocation8 + $0x380] sm:$0xff]
    %v346 = vld [vmem:[#allocation8 + $0x388] sm:$0xff]
    %v347 = vld [vmem:[#allocation8 + $0x390] sm:$0xff]
    %v348 = vld [vmem:[#allocation8 + $0x398] sm:$0xff]
    %v349 = vld [vmem:[#allocation8 + $0x3a0] sm:$0xff]
    %v350 = vld [vmem:[#allocation8 + $0x3a8] sm:$0xff]
    %v351 = vld [vmem:[#allocation8 + $0x3b0] sm:$0xff]
    %v352 = vld [vmem:[#allocation8 + $0x3b8] sm:$0xff]
    %v353 = vld [vmem:[#allocation8 + $0x3c0] sm:$0xff]
    %v354 = vld [vmem:[#allocation8 + $0x3c8] sm:$0xff]
    %v355 = vld [vmem:[#allocation8 + $0x3d0] sm:$0xff]
    %v356 = vld [vmem:[#allocation8 + $0x3d8] sm:$0xff]
    %v357 = vld [vmem:[#allocation8 + $0x3e0] sm:$0xff]
    %v358 = vld [vmem:[#allocation8 + $0x3e8] sm:$0xff]
    %v359 = vld [vmem:[#allocation8 + $0x3f0] sm:$0xff]
    %v360 = vld [vmem:[#allocation8 + $0x3f8] sm:$0xff]
    %v361 = vld [vmem:[%s4] sm:$0xf]
    %v363 = vlaneseq
    %v364 = vshrl.u32 %v363, 7
    %v365 = vsub.s32 0, %v364
    %v366 = vrot.slane %v361, %v365
    %v367 = vlaneseq
    %v368 = vshrl.u32 %v367, 7
    %v369 = vsub.s32 1, %v368
    %v370 = vrot.slane %v361, %v369
    %v371 = vlaneseq
    %v372 = vshrl.u32 %v371, 7
    %v373 = vsub.s32 2, %v372
    %v374 = vrot.slane %v361, %v373
    %v375 = vlaneseq
    %v376 = vshrl.u32 %v375, 7
    %v377 = vsub.s32 3, %v376
    %v378 = vrot.slane %v361, %v377
    %v511 = vunpack.c.l.b16 %v233
    %v512 = vunpack.c.h.b16 %v233
    %v513 = vunpack.c.l.b16 %v234
    %v514 = vunpack.c.h.b16 %v234
    %v515 = vunpack.c.l.b16 %v235
    %v516 = vunpack.c.h.b16 %v235
    %v517 = vunpack.c.l.b16 %v236
    %v518 = vunpack.c.h.b16 %v236
    %v519 = vunpack.c.l.b16 %v237
    %v520 = vunpack.c.h.b16 %v237
    %v521 = vunpack.c.l.b16 %v238
    %v522 = vunpack.c.h.b16 %v238
    %v523 = vunpack.c.l.b16 %v239
    %v524 = vunpack.c.h.b16 %v239
    %v525 = vunpack.c.l.b16 %v240
    %v526 = vunpack.c.h.b16 %v240
    %v527 = vunpack.c.l.b16 %v241
    %v528 = vunpack.c.h.b16 %v241
    %v529 = vunpack.c.l.b16 %v242
    %v530 = vunpack.c.h.b16 %v242
    %v531 = vunpack.c.l.b16 %v243
    %v532 = vunpack.c.h.b16 %v243
    %v533 = vunpack.c.l.b16 %v244
    %v534 = vunpack.c.h.b16 %v244
    %v535 = vunpack.c.l.b16 %v245
    %v536 = vunpack.c.h.b16 %v245
    %v537 = vunpack.c.l.b16 %v246
    %v538 = vunpack.c.h.b16 %v246
    %v539 = vunpack.c.l.b16 %v247
    %v540 = vunpack.c.h.b16 %v247
    %v541 = vunpack.c.l.b16 %v248
    %v542 = vunpack.c.h.b16 %v248
    %v543 = vunpack.c.l.b16 %v249
    %v544 = vunpack.c.h.b16 %v249
    %v545 = vunpack.c.l.b16 %v250
    %v546 = vunpack.c.h.b16 %v250
    %v547 = vunpack.c.l.b16 %v251
    %v548 = vunpack.c.h.b16 %v251
    %v549 = vunpack.c.l.b16 %v252
    %v550 = vunpack.c.h.b16 %v252
    %v551 = vunpack.c.l.b16 %v253
    %v552 = vunpack.c.h.b16 %v253
    %v553 = vunpack.c.l.b16 %v254
    %v554 = vunpack.c.h.b16 %v254
    %v555 = vunpack.c.l.b16 %v255
    %v556 = vunpack.c.h.b16 %v255
    %v557 = vunpack.c.l.b16 %v256
    %v558 = vunpack.c.h.b16 %v256
    %v559 = vunpack.c.l.b16 %v257
    %v560 = vunpack.c.h.b16 %v257
    %v561 = vunpack.c.l.b16 %v258
    %v562 = vunpack.c.h.b16 %v258
    %v563 = vunpack.c.l.b16 %v259
    %v564 = vunpack.c.h.b16 %v259
    %v565 = vunpack.c.l.b16 %v260
    %v566 = vunpack.c.h.b16 %v260
    %v567 = vunpack.c.l.b16 %v261
    %v568 = vunpack.c.h.b16 %v261
    %v569 = vunpack.c.l.b16 %v262
    %v570 = vunpack.c.h.b16 %v262
    %v571 = vunpack.c.l.b16 %v263
    %v572 = vunpack.c.h.b16 %v263
    %v573 = vunpack.c.l.b16 %v264
    %v574 = vunpack.c.h.b16 %v264
    %v575 = vunpack.c.l.b16 %v265
    %v576 = vunpack.c.h.b16 %v265
    %v577 = vunpack.c.l.b16 %v266
    %v578 = vunpack.c.h.b16 %v266
    %v579 = vunpack.c.l.b16 %v267
    %v580 = vunpack.c.h.b16 %v267
    %v581 = vunpack.c.l.b16 %v268
    %v582 = vunpack.c.h.b16 %v268
    %v583 = vunpack.c.l.b16 %v269
    %v584 = vunpack.c.h.b16 %v269
    %v585 = vunpack.c.l.b16 %v270
    %v586 = vunpack.c.h.b16 %v270
    %v587 = vunpack.c.l.b16 %v271
    %v588 = vunpack.c.h.b16 %v271
    %v589 = vunpack.c.l.b16 %v272
    %v590 = vunpack.c.h.b16 %v272
    %v591 = vunpack.c.l.b16 %v273
    %v592 = vunpack.c.h.b16 %v273
    %v593 = vunpack.c.l.b16 %v274
    %v594 = vunpack.c.h.b16 %v274
    %v595 = vunpack.c.l.b16 %v275
    %v596 = vunpack.c.h.b16 %v275
    %v597 = vunpack.c.l.b16 %v276
    %v598 = vunpack.c.h.b16 %v276
    %v599 = vunpack.c.l.b16 %v277
    %v600 = vunpack.c.h.b16 %v277
    %v601 = vunpack.c.l.b16 %v278
    %v602 = vunpack.c.h.b16 %v278
    %v603 = vunpack.c.l.b16 %v279
    %v604 = vunpack.c.h.b16 %v279
    %v605 = vunpack.c.l.b16 %v280
    %v606 = vunpack.c.h.b16 %v280
    %v607 = vunpack.c.l.b16 %v281
    %v608 = vunpack.c.h.b16 %v281
    %v609 = vunpack.c.l.b16 %v282
    %v610 = vunpack.c.h.b16 %v282
    %v611 = vunpack.c.l.b16 %v283
    %v612 = vunpack.c.h.b16 %v283
    %v613 = vunpack.c.l.b16 %v284
    %v614 = vunpack.c.h.b16 %v284
    %v615 = vunpack.c.l.b16 %v285
    %v616 = vunpack.c.h.b16 %v285
    %v617 = vunpack.c.l.b16 %v286
    %v618 = vunpack.c.h.b16 %v286
    %v619 = vunpack.c.l.b16 %v287
    %v620 = vunpack.c.h.b16 %v287
    %v621 = vunpack.c.l.b16 %v288
    %v622 = vunpack.c.h.b16 %v288
    %v623 = vunpack.c.l.b16 %v289
    %v624 = vunpack.c.h.b16 %v289
    %v625 = vunpack.c.l.b16 %v290
    %v626 = vunpack.c.h.b16 %v290
    %v627 = vunpack.c.l.b16 %v291
    %v628 = vunpack.c.h.b16 %v291
    %v629 = vunpack.c.l.b16 %v292
    %v630 = vunpack.c.h.b16 %v292
    %v631 = vunpack.c.l.b16 %v293
    %v632 = vunpack.c.h.b16 %v293
    %v633 = vunpack.c.l.b16 %v294
    %v634 = vunpack.c.h.b16 %v294
    %v635 = vunpack.c.l.b16 %v295
    %v636 = vunpack.c.h.b16 %v295
    %v637 = vunpack.c.l.b16 %v296
    %v638 = vunpack.c.h.b16 %v296
    %v639 = vunpack.c.l.b16 %v297
    %v640 = vunpack.c.h.b16 %v297
    %v641 = vunpack.c.l.b16 %v298
    %v642 = vunpack.c.h.b16 %v298
    %v643 = vunpack.c.l.b16 %v299
    %v644 = vunpack.c.h.b16 %v299
    %v645 = vunpack.c.l.b16 %v300
    %v646 = vunpack.c.h.b16 %v300
    %v647 = vunpack.c.l.b16 %v301
    %v648 = vunpack.c.h.b16 %v301
    %v649 = vunpack.c.l.b16 %v302
    %v650 = vunpack.c.h.b16 %v302
    %v651 = vunpack.c.l.b16 %v303
    %v652 = vunpack.c.h.b16 %v303
    %v653 = vunpack.c.l.b16 %v304
    %v654 = vunpack.c.h.b16 %v304
    %v655 = vunpack.c.l.b16 %v305
    %v656 = vunpack.c.h.b16 %v305
    %v657 = vunpack.c.l.b16 %v306
    %v658 = vunpack.c.h.b16 %v306
    %v659 = vunpack.c.l.b16 %v307
    %v660 = vunpack.c.h.b16 %v307
    %v661 = vunpack.c.l.b16 %v308
    %v662 = vunpack.c.h.b16 %v308
    %v663 = vunpack.c.l.b16 %v309
    %v664 = vunpack.c.h.b16 %v309
    %v665 = vunpack.c.l.b16 %v310
    %v666 = vunpack.c.h.b16 %v310
    %v667 = vunpack.c.l.b16 %v311
    %v668 = vunpack.c.h.b16 %v311
    %v669 = vunpack.c.l.b16 %v312
    %v670 = vunpack.c.h.b16 %v312
    %v671 = vunpack.c.l.b16 %v313
    %v672 = vunpack.c.h.b16 %v313
    %v673 = vunpack.c.l.b16 %v314
    %v674 = vunpack.c.h.b16 %v314
    %v675 = vunpack.c.l.b16 %v315
    %v676 = vunpack.c.h.b16 %v315
    %v677 = vunpack.c.l.b16 %v316
    %v678 = vunpack.c.h.b16 %v316
    %v679 = vunpack.c.l.b16 %v317
    %v680 = vunpack.c.h.b16 %v317
    %v681 = vunpack.c.l.b16 %v318
    %v682 = vunpack.c.h.b16 %v318
    %v683 = vunpack.c.l.b16 %v319
    %v684 = vunpack.c.h.b16 %v319
    %v685 = vunpack.c.l.b16 %v320
    %v686 = vunpack.c.h.b16 %v320
    %v687 = vunpack.c.l.b16 %v321
    %v688 = vunpack.c.h.b16 %v321
    %v689 = vunpack.c.l.b16 %v322
    %v690 = vunpack.c.h.b16 %v322
    %v691 = vunpack.c.l.b16 %v323
    %v692 = vunpack.c.h.b16 %v323
    %v693 = vunpack.c.l.b16 %v324
    %v694 = vunpack.c.h.b16 %v324
    %v695 = vunpack.c.l.b16 %v325
    %v696 = vunpack.c.h.b16 %v325
    %v697 = vunpack.c.l.b16 %v326
    %v698 = vunpack.c.h.b16 %v326
    %v699 = vunpack.c.l.b16 %v327
    %v700 = vunpack.c.h.b16 %v327
    %v701 = vunpack.c.l.b16 %v328
    %v702 = vunpack.c.h.b16 %v328
    %v703 = vunpack.c.l.b16 %v329
    %v704 = vunpack.c.h.b16 %v329
    %v705 = vunpack.c.l.b16 %v330
    %v706 = vunpack.c.h.b16 %v330
    %v707 = vunpack.c.l.b16 %v331
    %v708 = vunpack.c.h.b16 %v331
    %v709 = vunpack.c.l.b16 %v332
    %v710 = vunpack.c.h.b16 %v332
    %v711 = vunpack.c.l.b16 %v333
    %v712 = vunpack.c.h.b16 %v333
    %v713 = vunpack.c.l.b16 %v334
    %v714 = vunpack.c.h.b16 %v334
    %v715 = vunpack.c.l.b16 %v335
    %v716 = vunpack.c.h.b16 %v335
    %v717 = vunpack.c.l.b16 %v336
    %v718 = vunpack.c.h.b16 %v336
    %v719 = vunpack.c.l.b16 %v337
    %v720 = vunpack.c.h.b16 %v337
    %v721 = vunpack.c.l.b16 %v338
    %v722 = vunpack.c.h.b16 %v338
    %v723 = vunpack.c.l.b16 %v339
    %v724 = vunpack.c.h.b16 %v339
    %v725 = vunpack.c.l.b16 %v340
    %v726 = vunpack.c.h.b16 %v340
    %v727 = vunpack.c.l.b16 %v341
    %v728 = vunpack.c.h.b16 %v341
    %v729 = vunpack.c.l.b16 %v342
    %v730 = vunpack.c.h.b16 %v342
    %v731 = vunpack.c.l.b16 %v343
    %v732 = vunpack.c.h.b16 %v343
    %v733 = vunpack.c.l.b16 %v344
    %v734 = vunpack.c.h.b16 %v344
    %v735 = vunpack.c.l.b16 %v345
    %v736 = vunpack.c.h.b16 %v345
    %v737 = vunpack.c.l.b16 %v346
    %v738 = vunpack.c.h.b16 %v346
    %v739 = vunpack.c.l.b16 %v347
    %v740 = vunpack.c.h.b16 %v347
    %v741 = vunpack.c.l.b16 %v348
    %v742 = vunpack.c.h.b16 %v348
    %v743 = vunpack.c.l.b16 %v349
    %v744 = vunpack.c.h.b16 %v349
    %v745 = vunpack.c.l.b16 %v350
    %v746 = vunpack.c.h.b16 %v350
    %v747 = vunpack.c.l.b16 %v351
    %v748 = vunpack.c.h.b16 %v351
    %v749 = vunpack.c.l.b16 %v352
    %v750 = vunpack.c.h.b16 %v352
    %v751 = vunpack.c.l.b16 %v353
    %v752 = vunpack.c.h.b16 %v353
    %v753 = vunpack.c.l.b16 %v354
    %v754 = vunpack.c.h.b16 %v354
    %v755 = vunpack.c.l.b16 %v355
    %v756 = vunpack.c.h.b16 %v355
    %v757 = vunpack.c.l.b16 %v356
    %v758 = vunpack.c.h.b16 %v356
    %v759 = vunpack.c.l.b16 %v357
    %v760 = vunpack.c.h.b16 %v357
    %v761 = vunpack.c.l.b16 %v358
    %v762 = vunpack.c.h.b16 %v358
    %v763 = vunpack.c.l.b16 %v359
    %v764 = vunpack.c.h.b16 %v359
    %v765 = vunpack.c.l.b16 %v360
    %v766 = vunpack.c.h.b16 %v360
    %v767 = vpack.c.b16 %v515, %v511
    %v768 = vpack.c.b16 %v516, %v512
    %v769 = vpack.c.b16 %v517, %v513
    %v770 = vpack.c.b16 %v518, %v514
    %v771 = vpack.c.b16 %v523, %v519
    %v772 = vpack.c.b16 %v524, %v520
    %v773 = vpack.c.b16 %v525, %v521
    %v774 = vpack.c.b16 %v526, %v522
    %v775 = vpack.c.b16 %v531, %v527
    %v776 = vpack.c.b16 %v532, %v528
    %v777 = vpack.c.b16 %v533, %v529
    %v778 = vpack.c.b16 %v534, %v530
    %v779 = vpack.c.b16 %v539, %v535
    %v780 = vpack.c.b16 %v540, %v536
    %v781 = vpack.c.b16 %v541, %v537
    %v782 = vpack.c.b16 %v542, %v538
    %v783 = vpack.c.b16 %v547, %v543
    %v784 = vpack.c.b16 %v548, %v544
    %v785 = vpack.c.b16 %v549, %v545
    %v786 = vpack.c.b16 %v550, %v546
    %v787 = vpack.c.b16 %v555, %v551
    %v788 = vpack.c.b16 %v556, %v552
    %v789 = vpack.c.b16 %v557, %v553
    %v790 = vpack.c.b16 %v558, %v554
    %v791 = vpack.c.b16 %v563, %v559
    %v792 = vpack.c.b16 %v564, %v560
    %v793 = vpack.c.b16 %v565, %v561
    %v794 = vpack.c.b16 %v566, %v562
    %v795 = vpack.c.b16 %v571, %v567
    %v796 = vpack.c.b16 %v572, %v568
    %v797 = vpack.c.b16 %v573, %v569
    %v798 = vpack.c.b16 %v574, %v570
    %v799 = vpack.c.b16 %v579, %v575
    %v800 = vpack.c.b16 %v580, %v576
    %v801 = vpack.c.b16 %v581, %v577
    %v802 = vpack.c.b16 %v582, %v578
    %v803 = vpack.c.b16 %v587, %v583
    %v804 = vpack.c.b16 %v588, %v584
    %v805 = vpack.c.b16 %v589, %v585
    %v806 = vpack.c.b16 %v590, %v586
    %v807 = vpack.c.b16 %v595, %v591
    %v808 = vpack.c.b16 %v596, %v592
    %v809 = vpack.c.b16 %v597, %v593
    %v810 = vpack.c.b16 %v598, %v594
    %v811 = vpack.c.b16 %v603, %v599
    %v812 = vpack.c.b16 %v604, %v600
    %v813 = vpack.c.b16 %v605, %v601
    %v814 = vpack.c.b16 %v606, %v602
    %v815 = vpack.c.b16 %v611, %v607
    %v816 = vpack.c.b16 %v612, %v608
    %v817 = vpack.c.b16 %v613, %v609
    %v818 = vpack.c.b16 %v614, %v610
    %v819 = vpack.c.b16 %v619, %v615
    %v820 = vpack.c.b16 %v620, %v616
    %v821 = vpack.c.b16 %v621, %v617
    %v822 = vpack.c.b16 %v622, %v618
    %v823 = vpack.c.b16 %v627, %v623
    %v824 = vpack.c.b16 %v628, %v624
    %v825 = vpack.c.b16 %v629, %v625
    %v826 = vpack.c.b16 %v630, %v626
    %v827 = vpack.c.b16 %v635, %v631
    %v828 = vpack.c.b16 %v636, %v632
    %v829 = vpack.c.b16 %v637, %v633
    %v830 = vpack.c.b16 %v638, %v634
    %v831 = vpack.c.b16 %v643, %v639
    %v832 = vpack.c.b16 %v644, %v640
    %v833 = vpack.c.b16 %v645, %v641
    %v834 = vpack.c.b16 %v646, %v642
    %v835 = vpack.c.b16 %v651, %v647
    %v836 = vpack.c.b16 %v652, %v648
    %v837 = vpack.c.b16 %v653, %v649
    %v838 = vpack.c.b16 %v654, %v650
    %v839 = vpack.c.b16 %v659, %v655
    %v840 = vpack.c.b16 %v660, %v656
    %v841 = vpack.c.b16 %v661, %v657
    %v842 = vpack.c.b16 %v662, %v658
    %v843 = vpack.c.b16 %v667, %v663
    %v844 = vpack.c.b16 %v668, %v664
    %v845 = vpack.c.b16 %v669, %v665
    %v846 = vpack.c.b16 %v670, %v666
    %v847 = vpack.c.b16 %v675, %v671
    %v848 = vpack.c.b16 %v676, %v672
    %v849 = vpack.c.b16 %v677, %v673
    %v850 = vpack.c.b16 %v678, %v674
    %v851 = vpack.c.b16 %v683, %v679
    %v852 = vpack.c.b16 %v684, %v680
    %v853 = vpack.c.b16 %v685, %v681
    %v854 = vpack.c.b16 %v686, %v682
    %v855 = vpack.c.b16 %v691, %v687
    %v856 = vpack.c.b16 %v692, %v688
    %v857 = vpack.c.b16 %v693, %v689
    %v858 = vpack.c.b16 %v694, %v690
    %v859 = vpack.c.b16 %v699, %v695
    %v860 = vpack.c.b16 %v700, %v696
    %v861 = vpack.c.b16 %v701, %v697
    %v862 = vpack.c.b16 %v702, %v698
    %v863 = vpack.c.b16 %v707, %v703
    %v864 = vpack.c.b16 %v708, %v704
    %v865 = vpack.c.b16 %v709, %v705
    %v866 = vpack.c.b16 %v710, %v706
    %v867 = vpack.c.b16 %v715, %v711
    %v868 = vpack.c.b16 %v716, %v712
    %v869 = vpack.c.b16 %v717, %v713
    %v870 = vpack.c.b16 %v718, %v714
    %v871 = vpack.c.b16 %v723, %v719
    %v872 = vpack.c.b16 %v724, %v720
    %v873 = vpack.c.b16 %v725, %v721
    %v874 = vpack.c.b16 %v726, %v722
    %v875 = vpack.c.b16 %v731, %v727
    %v876 = vpack.c.b16 %v732, %v728
    %v877 = vpack.c.b16 %v733, %v729
    %v878 = vpack.c.b16 %v734, %v730
    %v879 = vpack.c.b16 %v739, %v735
    %v880 = vpack.c.b16 %v740, %v736
    %v881 = vpack.c.b16 %v741, %v737
    %v882 = vpack.c.b16 %v742, %v738
    %v883 = vpack.c.b16 %v747, %v743
    %v884 = vpack.c.b16 %v748, %v744
    %v885 = vpack.c.b16 %v749, %v745
    %v886 = vpack.c.b16 %v750, %v746
    %v887 = vpack.c.b16 %v755, %v751
    %v888 = vpack.c.b16 %v756, %v752
    %v889 = vpack.c.b16 %v757, %v753
    %v890 = vpack.c.b16 %v758, %v754
    %v891 = vpack.c.b16 %v763, %v759
    %v892 = vpack.c.b16 %v764, %v760
    %v893 = vpack.c.b16 %v765, %v761
    %v894 = vpack.c.b16 %v766, %v762
    %1023 = vmatprep.subr.bf16.mxu0 %v796
    %1024 = vmatpush1.bf16.msra.mxu0 %v795
    %1025 = vmatprep.subr.bf16.mxu0 %v792
    %1026 = vmatpush1.bf16.msra.mxu0 %v791
    %1027 = vmatprep.subr.bf16.mxu0 %v788
    %1028 = vmatpush1.bf16.msra.mxu0 %v787
    %1029 = vmatprep.subr.bf16.mxu0 %v784
    %1030 = vmatpush1.bf16.msra.mxu0 %v783
    %1031 = vmatprep.subr.bf16.mxu0 %v780
    %1032 = vmatpush1.bf16.msra.mxu0 %v779
    %1033 = vmatprep.subr.bf16.mxu0 %v776
    %1034 = vmatpush1.bf16.msra.mxu0 %v775
    %1035 = vmatprep.subr.bf16.mxu0 %v772
    %1036 = vmatpush1.bf16.msra.mxu0 %v771
    %1037 = vmatprep.subr.bf16.mxu0 %v768
    %1038 = vmatpush1.bf16.msra.mxu0 %v767
    %1039 = vmatprep.subr.bf16.mxu0 %v828
    %1040 = vmatpush2.bf16.msra.mxu0 %v827
    %1041 = vmatprep.subr.bf16.mxu0 %v824
    %1042 = vmatpush2.bf16.msra.mxu0 %v823
    %1043 = vmatprep.subr.bf16.mxu0 %v820
    %1044 = vmatpush2.bf16.msra.mxu0 %v819
    %1045 = vmatprep.subr.bf16.mxu0 %v816
    %1046 = vmatpush2.bf16.msra.mxu0 %v815
    %1047 = vmatprep.subr.bf16.mxu0 %v812
    %1048 = vmatpush2.bf16.msra.mxu0 %v811
    %1049 = vmatprep.subr.bf16.mxu0 %v808
    %1050 = vmatpush2.bf16.msra.mxu0 %v807
    %1051 = vmatprep.subr.bf16.mxu0 %v804
    %1052 = vmatpush2.bf16.msra.mxu0 %v803
    %1053 = vmatprep.subr.bf16.mxu0 %v800
    %1054 = vmatpush2.bf16.msra.mxu0 %v799
    %1055 = vmatprep.mubr.bf16.mxu0 %v230
    %1056 = vmatmul.mubr.bf16.gmra.mxu0 %v229
    %v1057 = vpop.f32.mrf.mxu0
    %v1058 = vadd.f32 %v366, %v1057
    %v1059 = vpop.f32.mrf.mxu0
    %v1060 = vadd.f32 %v370, %v1059
    %v1061 = vpop.f32.mrf.mxu0
    %v1062 = vpop.f32.mrf.mxu0
    %1063 = vdwg.mxu0
    %1064 = vmatprep.subr.bf16.mxu0 %v860
    %1065 = vmatpush1.bf16.msra.mxu0 %v859
    %1066 = vmatprep.subr.bf16.mxu0 %v856
    %1067 = vmatpush1.bf16.msra.mxu0 %v855
    %1068 = vmatprep.subr.bf16.mxu0 %v852
    %1069 = vmatpush1.bf16.msra.mxu0 %v851
    %1070 = vmatprep.subr.bf16.mxu0 %v848
    %1071 = vmatpush1.bf16.msra.mxu0 %v847
    %1072 = vmatprep.subr.bf16.mxu0 %v844
    %1073 = vmatpush1.bf16.msra.mxu0 %v843
    %1074 = vmatprep.subr.bf16.mxu0 %v840
    %1075 = vmatpush1.bf16.msra.mxu0 %v839
    %1076 = vmatprep.subr.bf16.mxu0 %v836
    %1077 = vmatpush1.bf16.msra.mxu0 %v835
    %1078 = vmatprep.subr.bf16.mxu0 %v832
    %1079 = vmatpush1.bf16.msra.mxu0 %v831
    %1080 = vmatprep.subr.bf16.mxu0 %v892
    %1081 = vmatpush2.bf16.msra.mxu0 %v891
    %1082 = vmatprep.subr.bf16.mxu0 %v888
    %1083 = vmatpush2.bf16.msra.mxu0 %v887
    %1084 = vmatprep.subr.bf16.mxu0 %v884
    %1085 = vmatpush2.bf16.msra.mxu0 %v883
    %1086 = vmatprep.subr.bf16.mxu0 %v880
    %1087 = vmatpush2.bf16.msra.mxu0 %v879
    %1088 = vmatprep.subr.bf16.mxu0 %v876
    %1089 = vmatpush2.bf16.msra.mxu0 %v875
    %1090 = vmatprep.subr.bf16.mxu0 %v872
    %1091 = vmatpush2.bf16.msra.mxu0 %v871
    %1092 = vmatprep.subr.bf16.mxu0 %v868
    %1093 = vmatpush2.bf16.msra.mxu0 %v867
    %1094 = vmatprep.subr.bf16.mxu0 %v864
    %1095 = vmatpush2.bf16.msra.mxu0 %v863
    %1096 = vmatprep.mubr.bf16.mxu0 %v232
    %1097 = vmatmul.mubr.bf16.gmra.mxu0 %v231
    %v1098 = vpop.f32.mrf.mxu0
    %v1099 = vadd.f32 %v1058, %v1098
    %v1100 = vpop.f32.mrf.mxu0
    %v1101 = vadd.f32 %v1060, %v1100
    %v1102 = vpop.f32.mrf.mxu0
    %v1103 = vpop.f32.mrf.mxu0
    %1104 = vdwg.mxu0
    %1105 = vmatprep.subr.bf16.mxu0 %v798
    %1106 = vmatpush1.bf16.msra.mxu0 %v797
    %1107 = vmatprep.subr.bf16.mxu0 %v794
    %1108 = vmatpush1.bf16.msra.mxu0 %v793
    %1109 = vmatprep.subr.bf16.mxu0 %v790
    %1110 = vmatpush1.bf16.msra.mxu0 %v789
    %1111 = vmatprep.subr.bf16.mxu0 %v786
    %1112 = vmatpush1.bf16.msra.mxu0 %v785
    %1113 = vmatprep.subr.bf16.mxu0 %v782
    %1114 = vmatpush1.bf16.msra.mxu0 %v781
    %1115 = vmatprep.subr.bf16.mxu0 %v778
    %1116 = vmatpush1.bf16.msra.mxu0 %v777
    %1117 = vmatprep.subr.bf16.mxu0 %v774
    %1118 = vmatpush1.bf16.msra.mxu0 %v773
    %1119 = vmatprep.subr.bf16.mxu0 %v770
    %1120 = vmatpush1.bf16.msra.mxu0 %v769
    %1121 = vmatprep.subr.bf16.mxu0 %v830
    %1122 = vmatpush2.bf16.msra.mxu0 %v829
    %1123 = vmatprep.subr.bf16.mxu0 %v826
    %1124 = vmatpush2.bf16.msra.mxu0 %v825
    %1125 = vmatprep.subr.bf16.mxu0 %v822
    %1126 = vmatpush2.bf16.msra.mxu0 %v821
    %1127 = vmatprep.subr.bf16.mxu0 %v818
    %1128 = vmatpush2.bf16.msra.mxu0 %v817
    %1129 = vmatprep.subr.bf16.mxu0 %v814
    %1130 = vmatpush2.bf16.msra.mxu0 %v813
    %1131 = vmatprep.subr.bf16.mxu0 %v810
    %1132 = vmatpush2.bf16.msra.mxu0 %v809
    %1133 = vmatprep.subr.bf16.mxu0 %v806
    %1134 = vmatpush2.bf16.msra.mxu0 %v805
    %1135 = vmatprep.subr.bf16.mxu0 %v802
    %1136 = vmatpush2.bf16.msra.mxu0 %v801
    %1137 = vmatprep.mubr.bf16.mxu0 %v230
    %1138 = vmatmul.mubr.bf16.gmra.mxu0 %v229
    %v1139 = vpop.f32.mrf.mxu0
    %v1140 = vadd.f32 %v374, %v1139
    %v1141 = vpop.f32.mrf.mxu0
    %v1142 = vadd.f32 %v378, %v1141
    %v1143 = vpop.f32.mrf.mxu0
    %v1144 = vpop.f32.mrf.mxu0
    %1145 = vdwg.mxu0
    %1146 = vmatprep.subr.bf16.mxu0 %v862
    %1147 = vmatpush1.bf16.msra.mxu0 %v861
    %1148 = vmatprep.subr.bf16.mxu0 %v858
    %1149 = vmatpush1.bf16.msra.mxu0 %v857
    %1150 = vmatprep.subr.bf16.mxu0 %v854
    %1151 = vmatpush1.bf16.msra.mxu0 %v853
    %1152 = vmatprep.subr.bf16.mxu0 %v850
    %1153 = vmatpush1.bf16.msra.mxu0 %v849
    %1154 = vmatprep.subr.bf16.mxu0 %v846
    %1155 = vmatpush1.bf16.msra.mxu0 %v845
    %1156 = vmatprep.subr.bf16.mxu0 %v842
    %1157 = vmatpush1.bf16.msra.mxu0 %v841
    %1158 = vmatprep.subr.bf16.mxu0 %v838
    %1159 = vmatpush1.bf16.msra.mxu0 %v837
    %1160 = vmatprep.subr.bf16.mxu0 %v834
    %1161 = vmatpush1.bf16.msra.mxu0 %v833
    %1162 = vmatprep.subr.bf16.mxu0 %v894
    %1163 = vmatpush2.bf16.msra.mxu0 %v893
    %1164 = vmatprep.subr.bf16.mxu0 %v890
    %1165 = vmatpush2.bf16.msra.mxu0 %v889
    %1166 = vmatprep.subr.bf16.mxu0 %v886
    %1167 = vmatpush2.bf16.msra.mxu0 %v885
    %1168 = vmatprep.subr.bf16.mxu0 %v882
    %1169 = vmatpush2.bf16.msra.mxu0 %v881
    %1170 = vmatprep.subr.bf16.mxu0 %v878
    %1171 = vmatpush2.bf16.msra.mxu0 %v877
    %1172 = vmatprep.subr.bf16.mxu0 %v874
    %1173 = vmatpush2.bf16.msra.mxu0 %v873
    %1174 = vmatprep.subr.bf16.mxu0 %v870
    %1175 = vmatpush2.bf16.msra.mxu0 %v869
    %1176 = vmatprep.subr.bf16.mxu0 %v866
    %1177 = vmatpush2.bf16.msra.mxu0 %v865
    %1178 = vmatprep.mubr.bf16.mxu0 %v232
    %1179 = vmatmul.mubr.bf16.gmra.mxu0 %v231
    %v1180 = vpop.f32.mrf.mxu0
    %v1181 = vadd.f32 %v1140, %v1180
    %v1182 = vpop.f32.mrf.mxu0
    %v1183 = vadd.f32 %v1142, %v1182
    %v1184 = vpop.f32.mrf.mxu0
    %v1185 = vpop.f32.mrf.mxu0
    %1186 = vdwg.mxu0
    %v1187 = vmax.f32 %v1099, 0.0
    %v1188 = vmax.f32 %v1101, 0.0
    %v1189 = vmax.f32 %v1181, 0.0
    %v1190 = vmax.f32 %v1183, 0.0
    %v1191 = vpack.c.bf16 %v1187, %v1187
    %v1192 = vpack.c.bf16 %v1188, %v1188
    %v1193 = vpack.c.bf16 %v1189, %v1189
    %v1194 = vpack.c.bf16 %v1190, %v1190
    %v1195 = vld [vmem:[#allocation10] sm:$0xf]
    %v1196 = vld [vmem:[#allocation10 + $0x4] sm:$0xf]
    %v1197 = vld [vmem:[#allocation10 + $0x8] sm:$0xf]
    %v1198 = vld [vmem:[#allocation10 + $0xc] sm:$0xf]
    %v1199 = vld [vmem:[#allocation10 + $0x10] sm:$0xf]
    %v1200 = vld [vmem:[#allocation10 + $0x14] sm:$0xf]
    %v1201 = vld [vmem:[#allocation10 + $0x18] sm:$0xf]
    %v1202 = vld [vmem:[#allocation10 + $0x1c] sm:$0xf]
    %v1203 = vld [vmem:[#allocation10 + $0x20] sm:$0xf]
    %v1204 = vld [vmem:[#allocation10 + $0x24] sm:$0xf]
    %v1205 = vld [vmem:[#allocation10 + $0x28] sm:$0xf]
    %v1206 = vld [vmem:[#allocation10 + $0x2c] sm:$0xf]
    %v1207 = vld [vmem:[#allocation10 + $0x30] sm:$0xf]
    %v1208 = vld [vmem:[#allocation10 + $0x34] sm:$0xf]
    %v1209 = vld [vmem:[#allocation10 + $0x38] sm:$0xf]
    %v1210 = vld [vmem:[#allocation10 + $0x3c] sm:$0xf]
    %v1211 = vld [vmem:[#allocation10 + $0x40] sm:$0xf]
    %v1212 = vld [vmem:[#allocation10 + $0x44] sm:$0xf]
    %v1213 = vld [vmem:[#allocation10 + $0x48] sm:$0xf]
    %v1214 = vld [vmem:[#allocation10 + $0x4c] sm:$0xf]
    %v1215 = vld [vmem:[#allocation10 + $0x50] sm:$0xf]
    %v1216 = vld [vmem:[#allocation10 + $0x54] sm:$0xf]
    %v1217 = vld [vmem:[#allocation10 + $0x58] sm:$0xf]
    %v1218 = vld [vmem:[#allocation10 + $0x5c] sm:$0xf]
    %v1219 = vld [vmem:[#allocation10 + $0x60] sm:$0xf]
    %v1220 = vld [vmem:[#allocation10 + $0x64] sm:$0xf]
    %v1221 = vld [vmem:[#allocation10 + $0x68] sm:$0xf]
    %v1222 = vld [vmem:[#allocation10 + $0x6c] sm:$0xf]
    %v1223 = vld [vmem:[#allocation10 + $0x70] sm:$0xf]
    %v1224 = vld [vmem:[#allocation10 + $0x74] sm:$0xf]
    %v1225 = vld [vmem:[#allocation10 + $0x78] sm:$0xf]
    %v1226 = vld [vmem:[#allocation10 + $0x7c] sm:$0xf]
    %v1227 = vld [vmem:[#allocation10 + $0x80] sm:$0xf]
    %v1228 = vld [vmem:[#allocation10 + $0x84] sm:$0xf]
    %v1229 = vld [vmem:[#allocation10 + $0x88] sm:$0xf]
    %v1230 = vld [vmem:[#allocation10 + $0x8c] sm:$0xf]
    %v1231 = vld [vmem:[#allocation10 + $0x90] sm:$0xf]
    %v1232 = vld [vmem:[#allocation10 + $0x94] sm:$0xf]
    %v1233 = vld [vmem:[#allocation10 + $0x98] sm:$0xf]
    %v1234 = vld [vmem:[#allocation10 + $0x9c] sm:$0xf]
    %v1235 = vld [vmem:[#allocation10 + $0xa0] sm:$0xf]
    %v1236 = vld [vmem:[#allocation10 + $0xa4] sm:$0xf]
    %v1237 = vld [vmem:[#allocation10 + $0xa8] sm:$0xf]
    %v1238 = vld [vmem:[#allocation10 + $0xac] sm:$0xf]
    %v1239 = vld [vmem:[#allocation10 + $0xb0] sm:$0xf]
    %v1240 = vld [vmem:[#allocation10 + $0xb4] sm:$0xf]
    %v1241 = vld [vmem:[#allocation10 + $0xb8] sm:$0xf]
    %v1242 = vld [vmem:[#allocation10 + $0xbc] sm:$0xf]
    %v1243 = vld [vmem:[#allocation10 + $0xc0] sm:$0xf]
    %v1244 = vld [vmem:[#allocation10 + $0xc4] sm:$0xf]
    %v1245 = vld [vmem:[#allocation10 + $0xc8] sm:$0xf]
    %v1246 = vld [vmem:[#allocation10 + $0xcc] sm:$0xf]
    %v1247 = vld [vmem:[#allocation10 + $0xd0] sm:$0xf]
    %v1248 = vld [vmem:[#allocation10 + $0xd4] sm:$0xf]
    %v1249 = vld [vmem:[#allocation10 + $0xd8] sm:$0xf]
    %v1250 = vld [vmem:[#allocation10 + $0xdc] sm:$0xf]
    %v1251 = vld [vmem:[#allocation10 + $0xe0] sm:$0xf]
    %v1252 = vld [vmem:[#allocation10 + $0xe4] sm:$0xf]
    %v1253 = vld [vmem:[#allocation10 + $0xe8] sm:$0xf]
    %v1254 = vld [vmem:[#allocation10 + $0xec] sm:$0xf]
    %v1255 = vld [vmem:[#allocation10 + $0xf0] sm:$0xf]
    %v1256 = vld [vmem:[#allocation10 + $0xf4] sm:$0xf]
    %v1257 = vld [vmem:[#allocation10 + $0xf8] sm:$0xf]
    %v1258 = vld [vmem:[#allocation10 + $0xfc] sm:$0xf]
    %v1259 = vld [vmem:[%s6] sm:$0x1]
    %v1261 = vlaneseq
    %v1262 = vshrl.u32 %v1261, 7
    %v1263 = vsub.s32 0, %v1262
    %v1264 = vrot.slane %v1259, %v1263
    %v1330 = vunpack.c.l.b16 %v1195
    %v1331 = vunpack.c.l.b16 %v1196
    %v1332 = vunpack.c.l.b16 %v1197
    %v1333 = vunpack.c.l.b16 %v1198
    %v1334 = vunpack.c.l.b16 %v1199
    %v1335 = vunpack.c.l.b16 %v1200
    %v1336 = vunpack.c.l.b16 %v1201
    %v1337 = vunpack.c.l.b16 %v1202
    %v1338 = vunpack.c.l.b16 %v1203
    %v1339 = vunpack.c.l.b16 %v1204
    %v1340 = vunpack.c.l.b16 %v1205
    %v1341 = vunpack.c.l.b16 %v1206
    %v1342 = vunpack.c.l.b16 %v1207
    %v1343 = vunpack.c.l.b16 %v1208
    %v1344 = vunpack.c.l.b16 %v1209
    %v1345 = vunpack.c.l.b16 %v1210
    %v1346 = vunpack.c.l.b16 %v1211
    %v1347 = vunpack.c.l.b16 %v1212
    %v1348 = vunpack.c.l.b16 %v1213
    %v1349 = vunpack.c.l.b16 %v1214
    %v1350 = vunpack.c.l.b16 %v1215
    %v1351 = vunpack.c.l.b16 %v1216
    %v1352 = vunpack.c.l.b16 %v1217
    %v1353 = vunpack.c.l.b16 %v1218
    %v1354 = vunpack.c.l.b16 %v1219
    %v1355 = vunpack.c.l.b16 %v1220
    %v1356 = vunpack.c.l.b16 %v1221
    %v1357 = vunpack.c.l.b16 %v1222
    %v1358 = vunpack.c.l.b16 %v1223
    %v1359 = vunpack.c.l.b16 %v1224
    %v1360 = vunpack.c.l.b16 %v1225
    %v1361 = vunpack.c.l.b16 %v1226
    %v1362 = vunpack.c.l.b16 %v1227
    %v1363 = vunpack.c.l.b16 %v1228
    %v1364 = vunpack.c.l.b16 %v1229
    %v1365 = vunpack.c.l.b16 %v1230
    %v1366 = vunpack.c.l.b16 %v1231
    %v1367 = vunpack.c.l.b16 %v1232
    %v1368 = vunpack.c.l.b16 %v1233
    %v1369 = vunpack.c.l.b16 %v1234
    %v1370 = vunpack.c.l.b16 %v1235
    %v1371 = vunpack.c.l.b16 %v1236
    %v1372 = vunpack.c.l.b16 %v1237
    %v1373 = vunpack.c.l.b16 %v1238
    %v1374 = vunpack.c.l.b16 %v1239
    %v1375 = vunpack.c.l.b16 %v1240
    %v1376 = vunpack.c.l.b16 %v1241
    %v1377 = vunpack.c.l.b16 %v1242
    %v1378 = vunpack.c.l.b16 %v1243
    %v1379 = vunpack.c.l.b16 %v1244
    %v1380 = vunpack.c.l.b16 %v1245
    %v1381 = vunpack.c.l.b16 %v1246
    %v1382 = vunpack.c.l.b16 %v1247
    %v1383 = vunpack.c.l.b16 %v1248
    %v1384 = vunpack.c.l.b16 %v1249
    %v1385 = vunpack.c.l.b16 %v1250
    %v1386 = vunpack.c.l.b16 %v1251
    %v1387 = vunpack.c.l.b16 %v1252
    %v1388 = vunpack.c.l.b16 %v1253
    %v1389 = vunpack.c.l.b16 %v1254
    %v1390 = vunpack.c.l.b16 %v1255
    %v1391 = vunpack.c.l.b16 %v1256
    %v1392 = vunpack.c.l.b16 %v1257
    %v1393 = vunpack.c.l.b16 %v1258
    %v1394 = vpack.c.b16 %v1331, %v1330
    %v1395 = vpack.c.b16 %v1333, %v1332
    %v1396 = vpack.c.b16 %v1335, %v1334
    %v1397 = vpack.c.b16 %v1337, %v1336
    %v1398 = vpack.c.b16 %v1339, %v1338
    %v1399 = vpack.c.b16 %v1341, %v1340
    %v1400 = vpack.c.b16 %v1343, %v1342
    %v1401 = vpack.c.b16 %v1345, %v1344
    %v1402 = vpack.c.b16 %v1347, %v1346
    %v1403 = vpack.c.b16 %v1349, %v1348
    %v1404 = vpack.c.b16 %v1351, %v1350
    %v1405 = vpack.c.b16 %v1353, %v1352
    %v1406 = vpack.c.b16 %v1355, %v1354
    %v1407 = vpack.c.b16 %v1357, %v1356
    %v1408 = vpack.c.b16 %v1359, %v1358
    %v1409 = vpack.c.b16 %v1361, %v1360
    %v1410 = vpack.c.b16 %v1363, %v1362
    %v1411 = vpack.c.b16 %v1365, %v1364
    %v1412 = vpack.c.b16 %v1367, %v1366
    %v1413 = vpack.c.b16 %v1369, %v1368
    %v1414 = vpack.c.b16 %v1371, %v1370
    %v1415 = vpack.c.b16 %v1373, %v1372
    %v1416 = vpack.c.b16 %v1375, %v1374
    %v1417 = vpack.c.b16 %v1377, %v1376
    %v1418 = vpack.c.b16 %v1379, %v1378
    %v1419 = vpack.c.b16 %v1381, %v1380
    %v1420 = vpack.c.b16 %v1383, %v1382
    %v1421 = vpack.c.b16 %v1385, %v1384
    %v1422 = vpack.c.b16 %v1387, %v1386
    %v1423 = vpack.c.b16 %v1389, %v1388
    %v1424 = vpack.c.b16 %v1391, %v1390
    %v1425 = vpack.c.b16 %v1393, %v1392
    %1458 = vmatprep.subr.bf16.mxu0 0
    %1459 = vmatpush1.bf16.msra.mxu0 %v1401
    %1460 = vmatprep.subr.bf16.mxu0 0
    %1461 = vmatpush1.bf16.msra.mxu0 %v1400
    %1462 = vmatprep.subr.bf16.mxu0 0
    %1463 = vmatpush1.bf16.msra.mxu0 %v1399
    %1464 = vmatprep.subr.bf16.mxu0 0
    %1465 = vmatpush1.bf16.msra.mxu0 %v1398
    %1466 = vmatprep.subr.bf16.mxu0 0
    %1467 = vmatpush1.bf16.msra.mxu0 %v1397
    %1468 = vmatprep.subr.bf16.mxu0 0
    %1469 = vmatpush1.bf16.msra.mxu0 %v1396
    %1470 = vmatprep.subr.bf16.mxu0 0
    %1471 = vmatpush1.bf16.msra.mxu0 %v1395
    %1472 = vmatprep.subr.bf16.mxu0 0
    %1473 = vmatpush1.bf16.msra.mxu0 %v1394
    %1474 = vmatprep.subr.bf16.mxu0 0
    %1475 = vmatpush2.bf16.msra.mxu0 %v1409
    %1476 = vmatprep.subr.bf16.mxu0 0
    %1477 = vmatpush2.bf16.msra.mxu0 %v1408
    %1478 = vmatprep.subr.bf16.mxu0 0
    %1479 = vmatpush2.bf16.msra.mxu0 %v1407
    %1480 = vmatprep.subr.bf16.mxu0 0
    %1481 = vmatpush2.bf16.msra.mxu0 %v1406
    %1482 = vmatprep.subr.bf16.mxu0 0
    %1483 = vmatpush2.bf16.msra.mxu0 %v1405
    %1484 = vmatprep.subr.bf16.mxu0 0
    %1485 = vmatpush2.bf16.msra.mxu0 %v1404
    %1486 = vmatprep.subr.bf16.mxu0 0
    %1487 = vmatpush2.bf16.msra.mxu0 %v1403
    %1488 = vmatprep.subr.bf16.mxu0 0
    %1489 = vmatpush2.bf16.msra.mxu0 %v1402
    %1490 = vmatprep.mubr.bf16.mxu0 %v1192
    %1491 = vmatmul.mubr.bf16.gmra.mxu0 %v1191
    %v1492 = vpop.f32.mrf.mxu0
    %v1493 = vadd.f32 %v1264, %v1492
    %v1494 = vpop.f32.mrf.mxu0
    %v1495 = vpop.f32.mrf.mxu0
    %v1496 = vpop.f32.mrf.mxu0
    %1497 = vdwg.mxu0
    %1498 = vmatprep.subr.bf16.mxu0 0
    %1499 = vmatpush1.bf16.msra.mxu0 %v1417
    %1500 = vmatprep.subr.bf16.mxu0 0
    %1501 = vmatpush1.bf16.msra.mxu0 %v1416
    %1502 = vmatprep.subr.bf16.mxu0 0
    %1503 = vmatpush1.bf16.msra.mxu0 %v1415
    %1504 = vmatprep.subr.bf16.mxu0 0
    %1505 = vmatpush1.bf16.msra.mxu0 %v1414
    %1506 = vmatprep.subr.bf16.mxu0 0
    %1507 = vmatpush1.bf16.msra.mxu0 %v1413
    %1508 = vmatprep.subr.bf16.mxu0 0
    %1509 = vmatpush1.bf16.msra.mxu0 %v1412
    %1510 = vmatprep.subr.bf16.mxu0 0
    %1511 = vmatpush1.bf16.msra.mxu0 %v1411
    %1512 = vmatprep.subr.bf16.mxu0 0
    %1513 = vmatpush1.bf16.msra.mxu0 %v1410
    %1514 = vmatprep.subr.bf16.mxu0 0
    %1515 = vmatpush2.bf16.msra.mxu0 %v1425
    %1516 = vmatprep.subr.bf16.mxu0 0
    %1517 = vmatpush2.bf16.msra.mxu0 %v1424
    %1518 = vmatprep.subr.bf16.mxu0 0
    %1519 = vmatpush2.bf16.msra.mxu0 %v1423
    %1520 = vmatprep.subr.bf16.mxu0 0
    %1521 = vmatpush2.bf16.msra.mxu0 %v1422
    %1522 = vmatprep.subr.bf16.mxu0 0
    %1523 = vmatpush2.bf16.msra.mxu0 %v1421
    %1524 = vmatprep.subr.bf16.mxu0 0
    %1525 = vmatpush2.bf16.msra.mxu0 %v1420
    %1526 = vmatprep.subr.bf16.mxu0 0
    %1527 = vmatpush2.bf16.msra.mxu0 %v1419
    %1528 = vmatprep.subr.bf16.mxu0 0
    %1529 = vmatpush2.bf16.msra.mxu0 %v1418
    %1530 = vmatprep.mubr.bf16.mxu0 %v1194
    %1531 = vmatmul.mubr.bf16.gmra.mxu0 %v1193
    %v1532 = vpop.f32.mrf.mxu0
    %v1533 = vadd.f32 %v1493, %v1532
    %v1534 = vpop.f32.mrf.mxu0
    %v1535 = vpop.f32.mrf.mxu0
    %v1536 = vpop.f32.mrf.mxu0
    %1537 = vdwg.mxu0
    %v1538 = vmul.f32 %v1533, 0.5
    %v1539 = vtanh.pop %v1538
    %v1540 = vmul.f32 %v1539, 0.5
    %v1541 = vadd.f32 %v1540, 0.5
    %v1542 = vmax.f32 %v1541, 0.0
    %v1543 = vmin.f32 %v1542, 1.0
    %v1544 = vpack.c.bf16 %v1543, %v1543
    %1545 = vst [vmem:[#allocation11] sm:$0xf] %v1544
    // Predicated region
    $region50: #{tpu_custom_call.1} parent=1 // pred_check
      _
    $region51: #{tpu_custom_call.1} parent=1 // pred_check_branch
      %1547 = sbr.rel (0) target = $region53
    $region52: #{tpu_custom_call.1} parent=1 // pred_region
      %s1549 = ssub.s32 64, 64
      %1550 = vsyncadd [#allocation4], %s1549
      %s1552 = sshll.u32 [#allocation11], 4
      %s1553 = int_to_ptr.vmem [resolvable:$true] %s1552
      %1555 = dma.vmem_to_hbm [thread:$0]  %s1553, 64, %s7, [#allocation4]
    $region53: #{tpu_custom_call.1} parent=1 // pred_fallthru
      _
    // Predicated region
    $region54: #{tpu_custom_call.1} parent=1 // pred_check
      _
    $region55: #{tpu_custom_call.1} parent=1 // pred_check_branch
      %1557 = sbr.rel (0) target = $region57
    $region56: #{tpu_custom_call.1} parent=1 // pred_region
      %1558 = dma.done [#allocation4], 64
    $region57: #{tpu_custom_call.1} parent=1 // pred_fallthru
      _
    %1559 = vsyncpa [#allocation3], 1
    %1560 = vsyncpa [#allocation6], 1
    %1561 = vsyncpa [#allocation9], 1
    %1562 = vsyncpa [#allocation4], 1

</llo_original>
